<compile_context>
chip_gen: v6e
topology: v6e:2x2x1
jax: 0.10.0
libtpu: 0.0.40
codegen_flags: <defaults>
</compile_context>

<pallas_src>
import jax
import jax.numpy as jnp
from jax.experimental import pallas as pl
from jax.experimental.pallas import tpu as pltpu

SELU_ALPHA = 1.6732632423543772
SELU_SCALE = 1.0507009873554805


def _lstm_attn_kernel(x_ref, wih_ref, whh_ref, b_ref, wfct_ref, bfc_ref, o_ref):
    # x_ref:    (T*Bp, inp)  time-major, flattened, batch padded to Bp (8-mult)
    # wih_ref:  (inp, 4H)
    # whh_ref:  (H,   4H)
    # b_ref:    (1,   4H)    b_ih + b_hh (folded)
    # wfct_ref: (1,   H)     fc weight, transposed
    # bfc_ref:  (1,   1)     fc bias (SMEM scalar)
    # o_ref:    (Bp,  T)     SELU(fc(h_t)) per (batch, step)
    Bp, T = o_ref.shape
    H = whh_ref.shape[0]

    # ---- Phase 1: hoisted input projection for all T steps (one MXU matmul),
    #               LSTM bias folded in. Each per-step slice below is an
    #               8-aligned sublane group (whole vregs, no shuffles). -------
    xproj = (jnp.dot(x_ref[...], wih_ref[...],
                     preferred_element_type=jnp.float32)
             + b_ref[...])                                    # (T*Bp, 4H)

    w_hh = whh_ref[...]                                       # loaded once
    w_row = wfct_ref[...]                                     # (1, H)

    # One tanh pass serves all four gates:
    #   sigmoid(x) = 0.5*tanh(0.5*x) + 0.5  (i, f, o columns, pre-scaled 0.5)
    #   tanh(x)                              (g columns, scale 1.0)
    col = jax.lax.broadcasted_iota(jnp.int32, (1, 4 * H), 1)
    is_g = (col >= 2 * H) & (col < 3 * H)
    gate_scale = jnp.where(is_g, 1.0, 0.5).astype(jnp.float32)  # (1, 4H), hoisted

    # Column-index row used to place each step's fc result into y_acc.
    tcol = jax.lax.broadcasted_iota(jnp.int32, (1, T), 1)        # (1, T), hoisted

    h = jnp.zeros((Bp, H), jnp.float32)
    c = jnp.zeros((Bp, H), jnp.float32)
    y_acc = jnp.zeros((Bp, T), jnp.float32)

    # ---- Phase 2: recurrence, fully unrolled (T static & small). ------------
    for t in range(T):
        gates = (xproj[t * Bp:(t + 1) * Bp, :]
                 + jnp.dot(h, w_hh, preferred_element_type=jnp.float32))  # (Bp,4H)
        tall = jnp.tanh(gates * gate_scale)      # single EUP pass over all gates
        i_g = 0.5 * tall[:, 0 * H:1 * H] + 0.5
        f_g = 0.5 * tall[:, 1 * H:2 * H] + 0.5
        g_g = tall[:, 2 * H:3 * H]
        o_g = 0.5 * tall[:, 3 * H:4 * H] + 0.5
        c = f_g * c + i_g * g_g
        h = o_g * jnp.tanh(c)
        # fc reduce (VPU mul + lane reduce) — off the recurrent dependence
        # chain, hides under the next step's MXU/EUP latency.  Accumulate the
        # column into the (Bp, T) register tile; store once at the end.
        y_col = jnp.sum(h * w_row, axis=-1, keepdims=True)    # (Bp, 1)
        y_acc = jnp.where(tcol == t, y_col, y_acc)            # place column t

    # ---- Phase 3: bias + SELU (clamped exp) + one output store. -------------
    y = y_acc + bfc_ref[0, 0]
    y = SELU_SCALE * jnp.where(
        y > 0.0, y, SELU_ALPHA * (jnp.exp(jnp.minimum(y, 0.0)) - 1.0))
    o_ref[...] = y.astype(o_ref.dtype)


def attention_module_forward(x, x_len, params):
    """x: (B, T, inp) float32; x_len unused (matches the PyTorch forward).

    params: dict with
      w_ih: (inp, 4H), w_hh: (H, 4H), b: (1, 4H)   (b = b_ih + b_hh)
      w_fc: (H, 1),    b_fc: (1, 1)
    returns (B, T, 1) float32.
    """
    del x_len  # the PyTorch forward ignores it as well
    B, T, inp = x.shape

    # Pad batch to a sublane multiple so every per-step tile is vreg-aligned.
    Bp = max(8, ((B + 7) // 8) * 8)
    x_p = jnp.pad(x, ((0, Bp - B), (0, 0), (0, 0)))            # zero rows, independent
    # time-major + flatten (T, Bp) so the kernel can do one big input matmul
    x_tm = jnp.transpose(x_p, (1, 0, 2)).reshape(T * Bp, inp)  # (T*Bp, inp)
    w_fc_t = params["w_fc"].T                                  # (1, H)

    out = pl.pallas_call(
        _lstm_attn_kernel,
        out_shape=jax.ShapeDtypeStruct((Bp, T), jnp.float32),
        in_specs=[
            pl.BlockSpec(memory_space=pltpu.MemorySpace.VMEM),   # x (T*Bp, inp)
            pl.BlockSpec(memory_space=pltpu.MemorySpace.VMEM),   # W_ih
            pl.BlockSpec(memory_space=pltpu.MemorySpace.VMEM),   # W_hh
            pl.BlockSpec(memory_space=pltpu.MemorySpace.VMEM),   # bias (1, 4H)
            pl.BlockSpec(memory_space=pltpu.MemorySpace.VMEM),   # W_fc^T (1, H)
            pl.BlockSpec(memory_space=pltpu.MemorySpace.SMEM),   # b_fc scalar
        ],
        out_specs=pl.BlockSpec(memory_space=pltpu.MemorySpace.VMEM),
    )(x_tm, params["w_ih"], params["w_hh"], params["b"], w_fc_t, params["b_fc"])

    return out[:B, :, None]                                    # (B, T, 1)


def init_params(key, inp_size, att_size):
    """Deterministic init matching the PyTorch module's parameter shapes.

    PyTorch stores weight_ih_l0 as (4H, inp); we keep the transposed layout
    (inp, 4H) so the kernel computes x @ W directly. b_ih and b_hh are folded
    into a single bias (identical math).
    """
    k1, k2, k3, k4, k5, k6 = jax.random.split(key, 6)
    bound = 1.0 / jnp.sqrt(att_size)
    u = lambda k, shape: jax.random.uniform(k, shape, jnp.float32, -bound, bound)
    w_ih = u(k1, (inp_size, 4 * att_size))
    w_hh = u(k2, (att_size, 4 * att_size))
    b = u(k3, (1, 4 * att_size)) + u(k4, (1, 4 * att_size))   # b_ih + b_hh
    w_fc = u(k5, (att_size, 1))
    b_fc = u(k6, (1, 1))
    return {"w_ih": w_ih, "w_hh": w_hh, "b": b, "w_fc": w_fc, "b_fc": b_fc}


def _reference_forward(x, params):
    """Pure-JAX reference (lax.scan LSTM) for a sanity check."""
    B, T, inp = x.shape
    H = params["w_hh"].shape[0]
    x_tm = jnp.transpose(x, (1, 0, 2))

    def step(carry, x_t):
        h, c = carry
        gates = x_t @ params["w_ih"] + h @ params["w_hh"] + params["b"]
        i = jax.nn.sigmoid(gates[:, 0 * H:1 * H])
        f = jax.nn.sigmoid(gates[:, 1 * H:2 * H])
        g = jnp.tanh(gates[:, 2 * H:3 * H])
        o = jax.nn.sigmoid(gates[:, 3 * H:4 * H])
        c = f * c + i * g
        h = o * jnp.tanh(c)
        return (h, c), h

    init = (jnp.zeros((B, H), jnp.float32), jnp.zeros((B, H), jnp.float32))
    _, hs = jax.lax.scan(step, init, x_tm)                     # (T, B, H)
    y = hs @ params["w_fc"] + params["b_fc"]                   # (T, B, 1)
    y = SELU_SCALE * jnp.where(y > 0, y, SELU_ALPHA * (jnp.exp(y) - 1.0))
    return jnp.transpose(y, (1, 0, 2))


if __name__ == "__main__":
    B, T, INP, ATT = 2, 8, 16, 32

    key = jax.random.PRNGKey(0)
    kx, kp = jax.random.split(key)
    x = jax.random.normal(kx, (B, T, INP), dtype=jnp.float32)
    x_len = jnp.full((B,), T, dtype=jnp.int32)   # unused by forward (as in PyTorch)
    params = init_params(kp, INP, ATT)

    out = attention_module_forward(x, x_len, params)
    out = jax.block_until_ready(out)

    ref = _reference_forward(x, params)
    assert out.shape == (B, T, 1)
    max_err = float(jnp.max(jnp.abs(out - ref)))
    assert jnp.allclose(out, ref, atol=1e-4, rtol=1e-4), max_err

    print("KERNEL_OK")
</pallas_src>

<mosaic_0001>
module attributes {stable_mosaic.version = 11 : i64} {
  func.func @_lstm_attn_kernel(%arg0: memref<64x16xf32, #tpu.memory_space<vmem>>, %arg1: memref<16x128xf32, #tpu.memory_space<vmem>>, %arg2: memref<32x128xf32, #tpu.memory_space<vmem>>, %arg3: memref<1x128xf32, #tpu.memory_space<vmem>>, %arg4: memref<1x32xf32, #tpu.memory_space<vmem>>, %arg5: memref<1x1xf32, #tpu.memory_space<smem>>, %arg6: memref<8x8xf32, #tpu.memory_space<vmem>>) attributes {dimension_semantics = [], scalar_prefetch = 0 : i64, scratch_operands = 0 : i64, tpu.core_type = #tpu.core_type<tc>} {
    %c0 = arith.constant 0 : index
    %c0_0 = arith.constant 0 : index
    %0 = vector.load %arg0[%c0, %c0_0] : memref<64x16xf32, #tpu.memory_space<vmem>>, vector<64x16xf32>
    %c0_1 = arith.constant 0 : index
    %c0_2 = arith.constant 0 : index
    %1 = vector.load %arg1[%c0_1, %c0_2] : memref<16x128xf32, #tpu.memory_space<vmem>>, vector<16x128xf32>
    %cst = arith.constant dense<0.000000e+00> : vector<64x128xf32>
    %2 = tpu.matmul %0, %1, %cst {dimension_numbers = #tpu.dot_dimension_numbers<[1], [0], [0], [1], [0, 0, 1, 1], [], []>} : vector<64x16xf32>, vector<16x128xf32>, vector<64x128xf32> -> vector<64x128xf32>
    %c0_3 = arith.constant 0 : index
    %c0_4 = arith.constant 0 : index
    %3 = vector.load %arg3[%c0_3, %c0_4] : memref<1x128xf32, #tpu.memory_space<vmem>>, vector<1x128xf32>
    %4 = vector.broadcast %3 : vector<1x128xf32> to vector<64x128xf32>
    %5 = arith.addf %2, %4 : vector<64x128xf32>
    %c0_5 = arith.constant 0 : index
    %c0_6 = arith.constant 0 : index
    %6 = vector.load %arg2[%c0_5, %c0_6] : memref<32x128xf32, #tpu.memory_space<vmem>>, vector<32x128xf32>
    %c0_7 = arith.constant 0 : index
    %c0_8 = arith.constant 0 : index
    %7 = vector.load %arg4[%c0_7, %c0_8] : memref<1x32xf32, #tpu.memory_space<vmem>>, vector<1x32xf32>
    %8 = tpu.iota {dimensions = array<i32: 1>} : vector<1x128xi32>
    %c64_i32 = arith.constant 64 : i32
    %9 = vector.broadcast %c64_i32 : i32 to vector<1x128xi32>
    %10 = arith.cmpi sge, %8, %9 : vector<1x128xi32>
    %c96_i32 = arith.constant 96 : i32
    %11 = vector.broadcast %c96_i32 : i32 to vector<1x128xi32>
    %12 = arith.cmpi slt, %8, %11 : vector<1x128xi32>
    %13 = arith.andi %10, %12 : vector<1x128xi1>
    %cst_9 = arith.constant 1.000000e+00 : f32
    %cst_10 = arith.constant 5.000000e-01 : f32
    %14 = vector.broadcast %cst_9 : f32 to vector<1x128xf32>
    %15 = vector.broadcast %cst_10 : f32 to vector<1x128xf32>
    %16 = arith.select %13, %14, %15 : vector<1x128xi1>, vector<1x128xf32>
    %17 = tpu.iota {dimensions = array<i32: 1>} : vector<1x8xi32>
    %cst_11 = arith.constant 0.000000e+00 : f32
    %18 = vector.broadcast %cst_11 : f32 to vector<8x32xf32>
    %cst_12 = arith.constant 0.000000e+00 : f32
    %19 = vector.broadcast %cst_12 : f32 to vector<8x32xf32>
    %cst_13 = arith.constant 0.000000e+00 : f32
    %20 = vector.broadcast %cst_13 : f32 to vector<8x8xf32>
    %21 = vector.extract_strided_slice %5 {offsets = [0, 0], sizes = [8, 128], strides = [1, 1]} : vector<64x128xf32> to vector<8x128xf32>
    %cst_14 = arith.constant dense<0.000000e+00> : vector<8x128xf32>
    %22 = tpu.matmul %18, %6, %cst_14 {dimension_numbers = #tpu.dot_dimension_numbers<[1], [0], [0], [1], [0, 0, 1, 1], [], []>} : vector<8x32xf32>, vector<32x128xf32>, vector<8x128xf32> -> vector<8x128xf32>
    %23 = arith.addf %21, %22 : vector<8x128xf32>
    %24 = vector.broadcast %16 : vector<1x128xf32> to vector<8x128xf32>
    %25 = arith.mulf %23, %24 : vector<8x128xf32>
    %26 = math.tanh %25 : vector<8x128xf32>
    %27 = vector.extract_strided_slice %26 {offsets = [0, 0], sizes = [8, 32], strides = [1, 1]} : vector<8x128xf32> to vector<8x32xf32>
    %cst_15 = arith.constant 5.000000e-01 : f32
    %28 = vector.broadcast %cst_15 : f32 to vector<8x32xf32>
    %29 = arith.mulf %28, %27 : vector<8x32xf32>
    %cst_16 = arith.constant 5.000000e-01 : f32
    %30 = vector.broadcast %cst_16 : f32 to vector<8x32xf32>
    %31 = arith.addf %29, %30 : vector<8x32xf32>
    %32 = vector.extract_strided_slice %26 {offsets = [0, 32], sizes = [8, 32], strides = [1, 1]} : vector<8x128xf32> to vector<8x32xf32>
    %cst_17 = arith.constant 5.000000e-01 : f32
    %33 = vector.broadcast %cst_17 : f32 to vector<8x32xf32>
    %34 = arith.mulf %33, %32 : vector<8x32xf32>
    %cst_18 = arith.constant 5.000000e-01 : f32
    %35 = vector.broadcast %cst_18 : f32 to vector<8x32xf32>
    %36 = arith.addf %34, %35 : vector<8x32xf32>
    %37 = vector.extract_strided_slice %26 {offsets = [0, 64], sizes = [8, 32], strides = [1, 1]} : vector<8x128xf32> to vector<8x32xf32>
    %38 = vector.extract_strided_slice %26 {offsets = [0, 96], sizes = [8, 32], strides = [1, 1]} : vector<8x128xf32> to vector<8x32xf32>
    %cst_19 = arith.constant 5.000000e-01 : f32
    %39 = vector.broadcast %cst_19 : f32 to vector<8x32xf32>
    %40 = arith.mulf %39, %38 : vector<8x32xf32>
    %cst_20 = arith.constant 5.000000e-01 : f32
    %41 = vector.broadcast %cst_20 : f32 to vector<8x32xf32>
    %42 = arith.addf %40, %41 : vector<8x32xf32>
    %43 = arith.mulf %36, %19 : vector<8x32xf32>
    %44 = arith.mulf %31, %37 : vector<8x32xf32>
    %45 = arith.addf %43, %44 : vector<8x32xf32>
    %46 = math.tanh %45 : vector<8x32xf32>
    %47 = arith.mulf %42, %46 : vector<8x32xf32>
    %48 = vector.broadcast %7 : vector<1x32xf32> to vector<8x32xf32>
    %49 = arith.mulf %47, %48 : vector<8x32xf32>
    %cst_21 = arith.constant dense<0.000000e+00> : vector<8xf32>
    %50 = vector.multi_reduction <add>, %49, %cst_21 [1] : vector<8x32xf32> to vector<8xf32>
    %51 = vector.shape_cast %50 : vector<8xf32> to vector<8x1xf32>
    %c0_i32 = arith.constant 0 : i32
    %52 = vector.broadcast %c0_i32 : i32 to vector<1x8xi32>
    %53 = arith.cmpi eq, %17, %52 : vector<1x8xi32>
    %54 = vector.shape_cast %53 : vector<1x8xi1> to vector<1x8xi1>
    %55 = vector.broadcast %54 : vector<1x8xi1> to vector<8x8xi1>
    %56 = vector.shape_cast %51 : vector<8x1xf32> to vector<8x1xf32>
    %57 = vector.broadcast %56 : vector<8x1xf32> to vector<8x8xf32>
    %58 = arith.select %55, %57, %20 : vector<8x8xi1>, vector<8x8xf32>
    %59 = vector.extract_strided_slice %5 {offsets = [8, 0], sizes = [8, 128], strides = [1, 1]} : vector<64x128xf32> to vector<8x128xf32>
    %cst_22 = arith.constant dense<0.000000e+00> : vector<8x128xf32>
    %60 = tpu.matmul %47, %6, %cst_22 {dimension_numbers = #tpu.dot_dimension_numbers<[1], [0], [0], [1], [0, 0, 1, 1], [], []>} : vector<8x32xf32>, vector<32x128xf32>, vector<8x128xf32> -> vector<8x128xf32>
    %61 = arith.addf %59, %60 : vector<8x128xf32>
    %62 = vector.broadcast %16 : vector<1x128xf32> to vector<8x128xf32>
    %63 = arith.mulf %61, %62 : vector<8x128xf32>
    %64 = math.tanh %63 : vector<8x128xf32>
    %65 = vector.extract_strided_slice %64 {offsets = [0, 0], sizes = [8, 32], strides = [1, 1]} : vector<8x128xf32> to vector<8x32xf32>
    %cst_23 = arith.constant 5.000000e-01 : f32
    %66 = vector.broadcast %cst_23 : f32 to vector<8x32xf32>
    %67 = arith.mulf %66, %65 : vector<8x32xf32>
    %cst_24 = arith.constant 5.000000e-01 : f32
    %68 = vector.broadcast %cst_24 : f32 to vector<8x32xf32>
    %69 = arith.addf %67, %68 : vector<8x32xf32>
    %70 = vector.extract_strided_slice %64 {offsets = [0, 32], sizes = [8, 32], strides = [1, 1]} : vector<8x128xf32> to vector<8x32xf32>
    %cst_25 = arith.constant 5.000000e-01 : f32
    %71 = vector.broadcast %cst_25 : f32 to vector<8x32xf32>
    %72 = arith.mulf %71, %70 : vector<8x32xf32>
    %cst_26 = arith.constant 5.000000e-01 : f32
    %73 = vector.broadcast %cst_26 : f32 to vector<8x32xf32>
    %74 = arith.addf %72, %73 : vector<8x32xf32>
    %75 = vector.extract_strided_slice %64 {offsets = [0, 64], sizes = [8, 32], strides = [1, 1]} : vector<8x128xf32> to vector<8x32xf32>
    %76 = vector.extract_strided_slice %64 {offsets = [0, 96], sizes = [8, 32], strides = [1, 1]} : vector<8x128xf32> to vector<8x32xf32>
    %cst_27 = arith.constant 5.000000e-01 : f32
    %77 = vector.broadcast %cst_27 : f32 to vector<8x32xf32>
    %78 = arith.mulf %77, %76 : vector<8x32xf32>
    %cst_28 = arith.constant 5.000000e-01 : f32
    %79 = vector.broadcast %cst_28 : f32 to vector<8x32xf32>
    %80 = arith.addf %78, %79 : vector<8x32xf32>
    %81 = arith.mulf %74, %45 : vector<8x32xf32>
    %82 = arith.mulf %69, %75 : vector<8x32xf32>
    %83 = arith.addf %81, %82 : vector<8x32xf32>
    %84 = math.tanh %83 : vector<8x32xf32>
    %85 = arith.mulf %80, %84 : vector<8x32xf32>
    %86 = vector.broadcast %7 : vector<1x32xf32> to vector<8x32xf32>
    %87 = arith.mulf %85, %86 : vector<8x32xf32>
    %cst_29 = arith.constant dense<0.000000e+00> : vector<8xf32>
    %88 = vector.multi_reduction <add>, %87, %cst_29 [1] : vector<8x32xf32> to vector<8xf32>
    %89 = vector.shape_cast %88 : vector<8xf32> to vector<8x1xf32>
    %c1_i32 = arith.constant 1 : i32
    %90 = vector.broadcast %c1_i32 : i32 to vector<1x8xi32>
    %91 = arith.cmpi eq, %17, %90 : vector<1x8xi32>
    %92 = vector.shape_cast %91 : vector<1x8xi1> to vector<1x8xi1>
    %93 = vector.broadcast %92 : vector<1x8xi1> to vector<8x8xi1>
    %94 = vector.shape_cast %89 : vector<8x1xf32> to vector<8x1xf32>
    %95 = vector.broadcast %94 : vector<8x1xf32> to vector<8x8xf32>
    %96 = arith.select %93, %95, %58 : vector<8x8xi1>, vector<8x8xf32>
    %97 = vector.extract_strided_slice %5 {offsets = [16, 0], sizes = [8, 128], strides = [1, 1]} : vector<64x128xf32> to vector<8x128xf32>
    %cst_30 = arith.constant dense<0.000000e+00> : vector<8x128xf32>
    %98 = tpu.matmul %85, %6, %cst_30 {dimension_numbers = #tpu.dot_dimension_numbers<[1], [0], [0], [1], [0, 0, 1, 1], [], []>} : vector<8x32xf32>, vector<32x128xf32>, vector<8x128xf32> -> vector<8x128xf32>
    %99 = arith.addf %97, %98 : vector<8x128xf32>
    %100 = vector.broadcast %16 : vector<1x128xf32> to vector<8x128xf32>
    %101 = arith.mulf %99, %100 : vector<8x128xf32>
    %102 = math.tanh %101 : vector<8x128xf32>
    %103 = vector.extract_strided_slice %102 {offsets = [0, 0], sizes = [8, 32], strides = [1, 1]} : vector<8x128xf32> to vector<8x32xf32>
    %cst_31 = arith.constant 5.000000e-01 : f32
    %104 = vector.broadcast %cst_31 : f32 to vector<8x32xf32>
    %105 = arith.mulf %104, %103 : vector<8x32xf32>
    %cst_32 = arith.constant 5.000000e-01 : f32
    %106 = vector.broadcast %cst_32 : f32 to vector<8x32xf32>
    %107 = arith.addf %105, %106 : vector<8x32xf32>
    %108 = vector.extract_strided_slice %102 {offsets = [0, 32], sizes = [8, 32], strides = [1, 1]} : vector<8x128xf32> to vector<8x32xf32>
    %cst_33 = arith.constant 5.000000e-01 : f32
    %109 = vector.broadcast %cst_33 : f32 to vector<8x32xf32>
    %110 = arith.mulf %109, %108 : vector<8x32xf32>
    %cst_34 = arith.constant 5.000000e-01 : f32
    %111 = vector.broadcast %cst_34 : f32 to vector<8x32xf32>
    %112 = arith.addf %110, %111 : vector<8x32xf32>
    %113 = vector.extract_strided_slice %102 {offsets = [0, 64], sizes = [8, 32], strides = [1, 1]} : vector<8x128xf32> to vector<8x32xf32>
    %114 = vector.extract_strided_slice %102 {offsets = [0, 96], sizes = [8, 32], strides = [1, 1]} : vector<8x128xf32> to vector<8x32xf32>
    %cst_35 = arith.constant 5.000000e-01 : f32
    %115 = vector.broadcast %cst_35 : f32 to vector<8x32xf32>
    %116 = arith.mulf %115, %114 : vector<8x32xf32>
    %cst_36 = arith.constant 5.000000e-01 : f32
    %117 = vector.broadcast %cst_36 : f32 to vector<8x32xf32>
    %118 = arith.addf %116, %117 : vector<8x32xf32>
    %119 = arith.mulf %112, %83 : vector<8x32xf32>
    %120 = arith.mulf %107, %113 : vector<8x32xf32>
    %121 = arith.addf %119, %120 : vector<8x32xf32>
    %122 = math.tanh %121 : vector<8x32xf32>
    %123 = arith.mulf %118, %122 : vector<8x32xf32>
    %124 = vector.broadcast %7 : vector<1x32xf32> to vector<8x32xf32>
    %125 = arith.mulf %123, %124 : vector<8x32xf32>
    %cst_37 = arith.constant dense<0.000000e+00> : vector<8xf32>
    %126 = vector.multi_reduction <add>, %125, %cst_37 [1] : vector<8x32xf32> to vector<8xf32>
    %127 = vector.shape_cast %126 : vector<8xf32> to vector<8x1xf32>
    %c2_i32 = arith.constant 2 : i32
    %128 = vector.broadcast %c2_i32 : i32 to vector<1x8xi32>
    %129 = arith.cmpi eq, %17, %128 : vector<1x8xi32>
    %130 = vector.shape_cast %129 : vector<1x8xi1> to vector<1x8xi1>
    %131 = vector.broadcast %130 : vector<1x8xi1> to vector<8x8xi1>
    %132 = vector.shape_cast %127 : vector<8x1xf32> to vector<8x1xf32>
    %133 = vector.broadcast %132 : vector<8x1xf32> to vector<8x8xf32>
    %134 = arith.select %131, %133, %96 : vector<8x8xi1>, vector<8x8xf32>
    %135 = vector.extract_strided_slice %5 {offsets = [24, 0], sizes = [8, 128], strides = [1, 1]} : vector<64x128xf32> to vector<8x128xf32>
    %cst_38 = arith.constant dense<0.000000e+00> : vector<8x128xf32>
    %136 = tpu.matmul %123, %6, %cst_38 {dimension_numbers = #tpu.dot_dimension_numbers<[1], [0], [0], [1], [0, 0, 1, 1], [], []>} : vector<8x32xf32>, vector<32x128xf32>, vector<8x128xf32> -> vector<8x128xf32>
    %137 = arith.addf %135, %136 : vector<8x128xf32>
    %138 = vector.broadcast %16 : vector<1x128xf32> to vector<8x128xf32>
    %139 = arith.mulf %137, %138 : vector<8x128xf32>
    %140 = math.tanh %139 : vector<8x128xf32>
    %141 = vector.extract_strided_slice %140 {offsets = [0, 0], sizes = [8, 32], strides = [1, 1]} : vector<8x128xf32> to vector<8x32xf32>
    %cst_39 = arith.constant 5.000000e-01 : f32
    %142 = vector.broadcast %cst_39 : f32 to vector<8x32xf32>
    %143 = arith.mulf %142, %141 : vector<8x32xf32>
    %cst_40 = arith.constant 5.000000e-01 : f32
    %144 = vector.broadcast %cst_40 : f32 to vector<8x32xf32>
    %145 = arith.addf %143, %144 : vector<8x32xf32>
    %146 = vector.extract_strided_slice %140 {offsets = [0, 32], sizes = [8, 32], strides = [1, 1]} : vector<8x128xf32> to vector<8x32xf32>
    %cst_41 = arith.constant 5.000000e-01 : f32
    %147 = vector.broadcast %cst_41 : f32 to vector<8x32xf32>
    %148 = arith.mulf %147, %146 : vector<8x32xf32>
    %cst_42 = arith.constant 5.000000e-01 : f32
    %149 = vector.broadcast %cst_42 : f32 to vector<8x32xf32>
    %150 = arith.addf %148, %149 : vector<8x32xf32>
    %151 = vector.extract_strided_slice %140 {offsets = [0, 64], sizes = [8, 32], strides = [1, 1]} : vector<8x128xf32> to vector<8x32xf32>
    %152 = vector.extract_strided_slice %140 {offsets = [0, 96], sizes = [8, 32], strides = [1, 1]} : vector<8x128xf32> to vector<8x32xf32>
    %cst_43 = arith.constant 5.000000e-01 : f32
    %153 = vector.broadcast %cst_43 : f32 to vector<8x32xf32>
    %154 = arith.mulf %153, %152 : vector<8x32xf32>
    %cst_44 = arith.constant 5.000000e-01 : f32
    %155 = vector.broadcast %cst_44 : f32 to vector<8x32xf32>
    %156 = arith.addf %154, %155 : vector<8x32xf32>
    %157 = arith.mulf %150, %121 : vector<8x32xf32>
    %158 = arith.mulf %145, %151 : vector<8x32xf32>
    %159 = arith.addf %157, %158 : vector<8x32xf32>
    %160 = math.tanh %159 : vector<8x32xf32>
    %161 = arith.mulf %156, %160 : vector<8x32xf32>
    %162 = vector.broadcast %7 : vector<1x32xf32> to vector<8x32xf32>
    %163 = arith.mulf %161, %162 : vector<8x32xf32>
    %cst_45 = arith.constant dense<0.000000e+00> : vector<8xf32>
    %164 = vector.multi_reduction <add>, %163, %cst_45 [1] : vector<8x32xf32> to vector<8xf32>
    %165 = vector.shape_cast %164 : vector<8xf32> to vector<8x1xf32>
    %c3_i32 = arith.constant 3 : i32
    %166 = vector.broadcast %c3_i32 : i32 to vector<1x8xi32>
    %167 = arith.cmpi eq, %17, %166 : vector<1x8xi32>
    %168 = vector.shape_cast %167 : vector<1x8xi1> to vector<1x8xi1>
    %169 = vector.broadcast %168 : vector<1x8xi1> to vector<8x8xi1>
    %170 = vector.shape_cast %165 : vector<8x1xf32> to vector<8x1xf32>
    %171 = vector.broadcast %170 : vector<8x1xf32> to vector<8x8xf32>
    %172 = arith.select %169, %171, %134 : vector<8x8xi1>, vector<8x8xf32>
    %173 = vector.extract_strided_slice %5 {offsets = [32, 0], sizes = [8, 128], strides = [1, 1]} : vector<64x128xf32> to vector<8x128xf32>
    %cst_46 = arith.constant dense<0.000000e+00> : vector<8x128xf32>
    %174 = tpu.matmul %161, %6, %cst_46 {dimension_numbers = #tpu.dot_dimension_numbers<[1], [0], [0], [1], [0, 0, 1, 1], [], []>} : vector<8x32xf32>, vector<32x128xf32>, vector<8x128xf32> -> vector<8x128xf32>
    %175 = arith.addf %173, %174 : vector<8x128xf32>
    %176 = vector.broadcast %16 : vector<1x128xf32> to vector<8x128xf32>
    %177 = arith.mulf %175, %176 : vector<8x128xf32>
    %178 = math.tanh %177 : vector<8x128xf32>
    %179 = vector.extract_strided_slice %178 {offsets = [0, 0], sizes = [8, 32], strides = [1, 1]} : vector<8x128xf32> to vector<8x32xf32>
    %cst_47 = arith.constant 5.000000e-01 : f32
    %180 = vector.broadcast %cst_47 : f32 to vector<8x32xf32>
    %181 = arith.mulf %180, %179 : vector<8x32xf32>
    %cst_48 = arith.constant 5.000000e-01 : f32
    %182 = vector.broadcast %cst_48 : f32 to vector<8x32xf32>
    %183 = arith.addf %181, %182 : vector<8x32xf32>
    %184 = vector.extract_strided_slice %178 {offsets = [0, 32], sizes = [8, 32], strides = [1, 1]} : vector<8x128xf32> to vector<8x32xf32>
    %cst_49 = arith.constant 5.000000e-01 : f32
    %185 = vector.broadcast %cst_49 : f32 to vector<8x32xf32>
    %186 = arith.mulf %185, %184 : vector<8x32xf32>
    %cst_50 = arith.constant 5.000000e-01 : f32
    %187 = vector.broadcast %cst_50 : f32 to vector<8x32xf32>
    %188 = arith.addf %186, %187 : vector<8x32xf32>
    %189 = vector.extract_strided_slice %178 {offsets = [0, 64], sizes = [8, 32], strides = [1, 1]} : vector<8x128xf32> to vector<8x32xf32>
    %190 = vector.extract_strided_slice %178 {offsets = [0, 96], sizes = [8, 32], strides = [1, 1]} : vector<8x128xf32> to vector<8x32xf32>
    %cst_51 = arith.constant 5.000000e-01 : f32
    %191 = vector.broadcast %cst_51 : f32 to vector<8x32xf32>
    %192 = arith.mulf %191, %190 : vector<8x32xf32>
    %cst_52 = arith.constant 5.000000e-01 : f32
    %193 = vector.broadcast %cst_52 : f32 to vector<8x32xf32>
    %194 = arith.addf %192, %193 : vector<8x32xf32>
    %195 = arith.mulf %188, %159 : vector<8x32xf32>
    %196 = arith.mulf %183, %189 : vector<8x32xf32>
    %197 = arith.addf %195, %196 : vector<8x32xf32>
    %198 = math.tanh %197 : vector<8x32xf32>
    %199 = arith.mulf %194, %198 : vector<8x32xf32>
    %200 = vector.broadcast %7 : vector<1x32xf32> to vector<8x32xf32>
    %201 = arith.mulf %199, %200 : vector<8x32xf32>
    %cst_53 = arith.constant dense<0.000000e+00> : vector<8xf32>
    %202 = vector.multi_reduction <add>, %201, %cst_53 [1] : vector<8x32xf32> to vector<8xf32>
    %203 = vector.shape_cast %202 : vector<8xf32> to vector<8x1xf32>
    %c4_i32 = arith.constant 4 : i32
    %204 = vector.broadcast %c4_i32 : i32 to vector<1x8xi32>
    %205 = arith.cmpi eq, %17, %204 : vector<1x8xi32>
    %206 = vector.shape_cast %205 : vector<1x8xi1> to vector<1x8xi1>
    %207 = vector.broadcast %206 : vector<1x8xi1> to vector<8x8xi1>
    %208 = vector.shape_cast %203 : vector<8x1xf32> to vector<8x1xf32>
    %209 = vector.broadcast %208 : vector<8x1xf32> to vector<8x8xf32>
    %210 = arith.select %207, %209, %172 : vector<8x8xi1>, vector<8x8xf32>
    %211 = vector.extract_strided_slice %5 {offsets = [40, 0], sizes = [8, 128], strides = [1, 1]} : vector<64x128xf32> to vector<8x128xf32>
    %cst_54 = arith.constant dense<0.000000e+00> : vector<8x128xf32>
    %212 = tpu.matmul %199, %6, %cst_54 {dimension_numbers = #tpu.dot_dimension_numbers<[1], [0], [0], [1], [0, 0, 1, 1], [], []>} : vector<8x32xf32>, vector<32x128xf32>, vector<8x128xf32> -> vector<8x128xf32>
    %213 = arith.addf %211, %212 : vector<8x128xf32>
    %214 = vector.broadcast %16 : vector<1x128xf32> to vector<8x128xf32>
    %215 = arith.mulf %213, %214 : vector<8x128xf32>
    %216 = math.tanh %215 : vector<8x128xf32>
    %217 = vector.extract_strided_slice %216 {offsets = [0, 0], sizes = [8, 32], strides = [1, 1]} : vector<8x128xf32> to vector<8x32xf32>
    %cst_55 = arith.constant 5.000000e-01 : f32
    %218 = vector.broadcast %cst_55 : f32 to vector<8x32xf32>
    %219 = arith.mulf %218, %217 : vector<8x32xf32>
    %cst_56 = arith.constant 5.000000e-01 : f32
    %220 = vector.broadcast %cst_56 : f32 to vector<8x32xf32>
    %221 = arith.addf %219, %220 : vector<8x32xf32>
    %222 = vector.extract_strided_slice %216 {offsets = [0, 32], sizes = [8, 32], strides = [1, 1]} : vector<8x128xf32> to vector<8x32xf32>
    %cst_57 = arith.constant 5.000000e-01 : f32
    %223 = vector.broadcast %cst_57 : f32 to vector<8x32xf32>
    %224 = arith.mulf %223, %222 : vector<8x32xf32>
    %cst_58 = arith.constant 5.000000e-01 : f32
    %225 = vector.broadcast %cst_58 : f32 to vector<8x32xf32>
    %226 = arith.addf %224, %225 : vector<8x32xf32>
    %227 = vector.extract_strided_slice %216 {offsets = [0, 64], sizes = [8, 32], strides = [1, 1]} : vector<8x128xf32> to vector<8x32xf32>
    %228 = vector.extract_strided_slice %216 {offsets = [0, 96], sizes = [8, 32], strides = [1, 1]} : vector<8x128xf32> to vector<8x32xf32>
    %cst_59 = arith.constant 5.000000e-01 : f32
    %229 = vector.broadcast %cst_59 : f32 to vector<8x32xf32>
    %230 = arith.mulf %229, %228 : vector<8x32xf32>
    %cst_60 = arith.constant 5.000000e-01 : f32
    %231 = vector.broadcast %cst_60 : f32 to vector<8x32xf32>
    %232 = arith.addf %230, %231 : vector<8x32xf32>
    %233 = arith.mulf %226, %197 : vector<8x32xf32>
    %234 = arith.mulf %221, %227 : vector<8x32xf32>
    %235 = arith.addf %233, %234 : vector<8x32xf32>
    %236 = math.tanh %235 : vector<8x32xf32>
    %237 = arith.mulf %232, %236 : vector<8x32xf32>
    %238 = vector.broadcast %7 : vector<1x32xf32> to vector<8x32xf32>
    %239 = arith.mulf %237, %238 : vector<8x32xf32>
    %cst_61 = arith.constant dense<0.000000e+00> : vector<8xf32>
    %240 = vector.multi_reduction <add>, %239, %cst_61 [1] : vector<8x32xf32> to vector<8xf32>
    %241 = vector.shape_cast %240 : vector<8xf32> to vector<8x1xf32>
    %c5_i32 = arith.constant 5 : i32
    %242 = vector.broadcast %c5_i32 : i32 to vector<1x8xi32>
    %243 = arith.cmpi eq, %17, %242 : vector<1x8xi32>
    %244 = vector.shape_cast %243 : vector<1x8xi1> to vector<1x8xi1>
    %245 = vector.broadcast %244 : vector<1x8xi1> to vector<8x8xi1>
    %246 = vector.shape_cast %241 : vector<8x1xf32> to vector<8x1xf32>
    %247 = vector.broadcast %246 : vector<8x1xf32> to vector<8x8xf32>
    %248 = arith.select %245, %247, %210 : vector<8x8xi1>, vector<8x8xf32>
    %249 = vector.extract_strided_slice %5 {offsets = [48, 0], sizes = [8, 128], strides = [1, 1]} : vector<64x128xf32> to vector<8x128xf32>
    %cst_62 = arith.constant dense<0.000000e+00> : vector<8x128xf32>
    %250 = tpu.matmul %237, %6, %cst_62 {dimension_numbers = #tpu.dot_dimension_numbers<[1], [0], [0], [1], [0, 0, 1, 1], [], []>} : vector<8x32xf32>, vector<32x128xf32>, vector<8x128xf32> -> vector<8x128xf32>
    %251 = arith.addf %249, %250 : vector<8x128xf32>
    %252 = vector.broadcast %16 : vector<1x128xf32> to vector<8x128xf32>
    %253 = arith.mulf %251, %252 : vector<8x128xf32>
    %254 = math.tanh %253 : vector<8x128xf32>
    %255 = vector.extract_strided_slice %254 {offsets = [0, 0], sizes = [8, 32], strides = [1, 1]} : vector<8x128xf32> to vector<8x32xf32>
    %cst_63 = arith.constant 5.000000e-01 : f32
    %256 = vector.broadcast %cst_63 : f32 to vector<8x32xf32>
    %257 = arith.mulf %256, %255 : vector<8x32xf32>
    %cst_64 = arith.constant 5.000000e-01 : f32
    %258 = vector.broadcast %cst_64 : f32 to vector<8x32xf32>
    %259 = arith.addf %257, %258 : vector<8x32xf32>
    %260 = vector.extract_strided_slice %254 {offsets = [0, 32], sizes = [8, 32], strides = [1, 1]} : vector<8x128xf32> to vector<8x32xf32>
    %cst_65 = arith.constant 5.000000e-01 : f32
    %261 = vector.broadcast %cst_65 : f32 to vector<8x32xf32>
    %262 = arith.mulf %261, %260 : vector<8x32xf32>
    %cst_66 = arith.constant 5.000000e-01 : f32
    %263 = vector.broadcast %cst_66 : f32 to vector<8x32xf32>
    %264 = arith.addf %262, %263 : vector<8x32xf32>
    %265 = vector.extract_strided_slice %254 {offsets = [0, 64], sizes = [8, 32], strides = [1, 1]} : vector<8x128xf32> to vector<8x32xf32>
    %266 = vector.extract_strided_slice %254 {offsets = [0, 96], sizes = [8, 32], strides = [1, 1]} : vector<8x128xf32> to vector<8x32xf32>
    %cst_67 = arith.constant 5.000000e-01 : f32
    %267 = vector.broadcast %cst_67 : f32 to vector<8x32xf32>
    %268 = arith.mulf %267, %266 : vector<8x32xf32>
    %cst_68 = arith.constant 5.000000e-01 : f32
    %269 = vector.broadcast %cst_68 : f32 to vector<8x32xf32>
    %270 = arith.addf %268, %269 : vector<8x32xf32>
    %271 = arith.mulf %264, %235 : vector<8x32xf32>
    %272 = arith.mulf %259, %265 : vector<8x32xf32>
    %273 = arith.addf %271, %272 : vector<8x32xf32>
    %274 = math.tanh %273 : vector<8x32xf32>
    %275 = arith.mulf %270, %274 : vector<8x32xf32>
    %276 = vector.broadcast %7 : vector<1x32xf32> to vector<8x32xf32>
    %277 = arith.mulf %275, %276 : vector<8x32xf32>
    %cst_69 = arith.constant dense<0.000000e+00> : vector<8xf32>
    %278 = vector.multi_reduction <add>, %277, %cst_69 [1] : vector<8x32xf32> to vector<8xf32>
    %279 = vector.shape_cast %278 : vector<8xf32> to vector<8x1xf32>
    %c6_i32 = arith.constant 6 : i32
    %280 = vector.broadcast %c6_i32 : i32 to vector<1x8xi32>
    %281 = arith.cmpi eq, %17, %280 : vector<1x8xi32>
    %282 = vector.shape_cast %281 : vector<1x8xi1> to vector<1x8xi1>
    %283 = vector.broadcast %282 : vector<1x8xi1> to vector<8x8xi1>
    %284 = vector.shape_cast %279 : vector<8x1xf32> to vector<8x1xf32>
    %285 = vector.broadcast %284 : vector<8x1xf32> to vector<8x8xf32>
    %286 = arith.select %283, %285, %248 : vector<8x8xi1>, vector<8x8xf32>
    %287 = vector.extract_strided_slice %5 {offsets = [56, 0], sizes = [8, 128], strides = [1, 1]} : vector<64x128xf32> to vector<8x128xf32>
    %cst_70 = arith.constant dense<0.000000e+00> : vector<8x128xf32>
    %288 = tpu.matmul %275, %6, %cst_70 {dimension_numbers = #tpu.dot_dimension_numbers<[1], [0], [0], [1], [0, 0, 1, 1], [], []>} : vector<8x32xf32>, vector<32x128xf32>, vector<8x128xf32> -> vector<8x128xf32>
    %289 = arith.addf %287, %288 : vector<8x128xf32>
    %290 = vector.broadcast %16 : vector<1x128xf32> to vector<8x128xf32>
    %291 = arith.mulf %289, %290 : vector<8x128xf32>
    %292 = math.tanh %291 : vector<8x128xf32>
    %293 = vector.extract_strided_slice %292 {offsets = [0, 0], sizes = [8, 32], strides = [1, 1]} : vector<8x128xf32> to vector<8x32xf32>
    %cst_71 = arith.constant 5.000000e-01 : f32
    %294 = vector.broadcast %cst_71 : f32 to vector<8x32xf32>
    %295 = arith.mulf %294, %293 : vector<8x32xf32>
    %cst_72 = arith.constant 5.000000e-01 : f32
    %296 = vector.broadcast %cst_72 : f32 to vector<8x32xf32>
    %297 = arith.addf %295, %296 : vector<8x32xf32>
    %298 = vector.extract_strided_slice %292 {offsets = [0, 32], sizes = [8, 32], strides = [1, 1]} : vector<8x128xf32> to vector<8x32xf32>
    %cst_73 = arith.constant 5.000000e-01 : f32
    %299 = vector.broadcast %cst_73 : f32 to vector<8x32xf32>
    %300 = arith.mulf %299, %298 : vector<8x32xf32>
    %cst_74 = arith.constant 5.000000e-01 : f32
    %301 = vector.broadcast %cst_74 : f32 to vector<8x32xf32>
    %302 = arith.addf %300, %301 : vector<8x32xf32>
    %303 = vector.extract_strided_slice %292 {offsets = [0, 64], sizes = [8, 32], strides = [1, 1]} : vector<8x128xf32> to vector<8x32xf32>
    %304 = vector.extract_strided_slice %292 {offsets = [0, 96], sizes = [8, 32], strides = [1, 1]} : vector<8x128xf32> to vector<8x32xf32>
    %cst_75 = arith.constant 5.000000e-01 : f32
    %305 = vector.broadcast %cst_75 : f32 to vector<8x32xf32>
    %306 = arith.mulf %305, %304 : vector<8x32xf32>
    %cst_76 = arith.constant 5.000000e-01 : f32
    %307 = vector.broadcast %cst_76 : f32 to vector<8x32xf32>
    %308 = arith.addf %306, %307 : vector<8x32xf32>
    %309 = arith.mulf %302, %273 : vector<8x32xf32>
    %310 = arith.mulf %297, %303 : vector<8x32xf32>
    %311 = arith.addf %309, %310 : vector<8x32xf32>
    %312 = math.tanh %311 : vector<8x32xf32>
    %313 = arith.mulf %308, %312 : vector<8x32xf32>
    %314 = vector.broadcast %7 : vector<1x32xf32> to vector<8x32xf32>
    %315 = arith.mulf %313, %314 : vector<8x32xf32>
    %cst_77 = arith.constant dense<0.000000e+00> : vector<8xf32>
    %316 = vector.multi_reduction <add>, %315, %cst_77 [1] : vector<8x32xf32> to vector<8xf32>
    %317 = vector.shape_cast %316 : vector<8xf32> to vector<8x1xf32>
    %c7_i32 = arith.constant 7 : i32
    %318 = vector.broadcast %c7_i32 : i32 to vector<1x8xi32>
    %319 = arith.cmpi eq, %17, %318 : vector<1x8xi32>
    %320 = vector.shape_cast %319 : vector<1x8xi1> to vector<1x8xi1>
    %321 = vector.broadcast %320 : vector<1x8xi1> to vector<8x8xi1>
    %322 = vector.shape_cast %317 : vector<8x1xf32> to vector<8x1xf32>
    %323 = vector.broadcast %322 : vector<8x1xf32> to vector<8x8xf32>
    %324 = arith.select %321, %323, %286 : vector<8x8xi1>, vector<8x8xf32>
    %c0_78 = arith.constant 0 : index
    %c0_79 = arith.constant 0 : index
    %325 = memref.load %arg5[%c0_78, %c0_79] : memref<1x1xf32, #tpu.memory_space<smem>>
    %326 = vector.broadcast %325 : f32 to vector<8x8xf32>
    %327 = arith.addf %324, %326 : vector<8x8xf32>
    %cst_80 = arith.constant 0.000000e+00 : f32
    %328 = vector.broadcast %cst_80 : f32 to vector<8x8xf32>
    %329 = arith.cmpf ogt, %327, %328 : vector<8x8xf32>
    %cst_81 = arith.constant 0.000000e+00 : f32
    %330 = vector.broadcast %cst_81 : f32 to vector<8x8xf32>
    %331 = arith.minimumf %327, %330 : vector<8x8xf32>
    %332 = math.exp %331 : vector<8x8xf32>
    %cst_82 = arith.constant 1.000000e+00 : f32
    %333 = vector.broadcast %cst_82 : f32 to vector<8x8xf32>
    %334 = arith.subf %332, %333 : vector<8x8xf32>
    %cst_83 = arith.constant 1.67326319 : f32
    %335 = vector.broadcast %cst_83 : f32 to vector<8x8xf32>
    %336 = arith.mulf %335, %334 : vector<8x8xf32>
    %337 = arith.select %329, %327, %336 : vector<8x8xi1>, vector<8x8xf32>
    %cst_84 = arith.constant 1.05070102 : f32
    %338 = vector.broadcast %cst_84 : f32 to vector<8x8xf32>
    %339 = arith.mulf %338, %337 : vector<8x8xf32>
    %c0_85 = arith.constant 0 : index
    %c0_86 = arith.constant 0 : index
    %340 = vector.load %arg6[%c0_85, %c0_86] : memref<8x8xf32, #tpu.memory_space<vmem>>, vector<8x8xf32>
    tpu.vector_store %arg6[%c0_85, %c0_86], %339 {strides = array<i32>} : memref<8x8xf32, #tpu.memory_space<vmem>>, vector<8x8xf32>,
    return
  }
}

</mosaic_0001>

<llo_original>
// kernel: tpu_custom_call.1
$region0: #{tpu_custom_call.1}
  #allocation0 [shape = 'u32[]', space=smem, size = 0x4, offset = 0x4, fixed_abs, tag = 'smem constant byte address 0x4 - core index']
  #allocation1 [shape = 'u32[144,128]{1,0:T(1,128)}', space=vmem, size = 0x12000, scoped, tag = 'internal scratch']
  #allocation2 [shape = 'f32[1,1]{1,0:T(1,128)S(6)}', space=smem, size = 0x200, scoped, tag = 'scoped memory for tpu_custom_call.1']
  %s0 = inlined_call_operand.vmem [shape: f32[64,16], index: 0, kind: input, shape index: {}]
  %s1 = inlined_call_operand.vmem [shape: f32[16,128], index: 1, kind: input, shape index: {}]
  %s2 = inlined_call_operand.vmem [shape: f32[32,128], index: 2, kind: input, shape index: {}]
  %s3 = inlined_call_operand.vmem [shape: f32[1,128], index: 3, kind: input, shape index: {}]
  %s4 = inlined_call_operand.vmem [shape: f32[1,32], index: 4, kind: input, shape index: {}]
  %s5 = inlined_call_operand.<no memory space> [shape: f32[1,1], index: 5, kind: input, shape index: {}]
  %s6 = inlined_call_operand.hbm [shape: f32[8,8], index: 6, kind: output, shape index: {}]
  %s7 = sld [smem:[#allocation0]]
  $region34: #{tpu_custom_call.1} parent=0
    _
  %s9 = ssub.s32 1, %s7
  %s10 = scalar_select 0, %s9, %s7
  %11 = sst [smem:[#allocation2]] %s5
  $region1: #{tpu_custom_call.1} parent=0
    #allocation3 [shape = 'u8[4096]{0}', space=vmem, size = 0x1000, scoped, tag = 'output window, operand 0, single buffered']
    #allocation4 [shape = 's32[1]{0}', space=sflag, size = 0x4, scoped, tag = 'scoped memory for tpu_custom_call.1']
    %12 = vsyncpa [#allocation4], 0
    // Predicated region
    $region2: #{tpu_custom_call.1} parent=1 // pred_check
      _
    $region3: #{tpu_custom_call.1} parent=1 // pred_check_branch
      %14 = sbr.rel (0) target = $region5
    $region4: #{tpu_custom_call.1} parent=1 // pred_region
      _
    $region5: #{tpu_custom_call.1} parent=1 // pred_fallthru
      _
    // Predicated region
    $region6: #{tpu_custom_call.1} parent=1 // pred_check
      _
    $region7: #{tpu_custom_call.1} parent=1 // pred_check_branch
      %16 = sbr.rel (0) target = $region9
    $region8: #{tpu_custom_call.1} parent=1 // pred_region
      _
    $region9: #{tpu_custom_call.1} parent=1 // pred_fallthru
      _
    // Predicated region
    $region10: #{tpu_custom_call.1} parent=1 // pred_check
      _
    $region11: #{tpu_custom_call.1} parent=1 // pred_check_branch
      %18 = sbr.rel (0) target = $region13
    $region12: #{tpu_custom_call.1} parent=1 // pred_region
      _
    $region13: #{tpu_custom_call.1} parent=1 // pred_fallthru
      _
    // Predicated region
    $region14: #{tpu_custom_call.1} parent=1 // pred_check
      _
    $region15: #{tpu_custom_call.1} parent=1 // pred_check_branch
      %20 = sbr.rel (0) target = $region17
    $region16: #{tpu_custom_call.1} parent=1 // pred_region
      _
    $region17: #{tpu_custom_call.1} parent=1 // pred_fallthru
      _
    // Predicated region
    $region18: #{tpu_custom_call.1} parent=1 // pred_check
      _
    $region19: #{tpu_custom_call.1} parent=1 // pred_check_branch
      %22 = sbr.rel (0) target = $region21
    $region20: #{tpu_custom_call.1} parent=1 // pred_region
      _
    $region21: #{tpu_custom_call.1} parent=1 // pred_fallthru
      _
    // Predicated region
    $region22: #{tpu_custom_call.1} parent=1 // pred_check
      _
    $region23: #{tpu_custom_call.1} parent=1 // pred_check_branch
      %24 = sbr.rel (0) target = $region25
    $region24: #{tpu_custom_call.1} parent=1 // pred_region
      _
    $region25: #{tpu_custom_call.1} parent=1 // pred_fallthru
      _
    %v25 = vld [vmem:[%s0] sm:$0xff]
    %v26 = vld [vmem:[%s0 + $0x8] sm:$0xff]
    %v27 = vld [vmem:[%s0 + $0x10] sm:$0xff]
    %v28 = vld [vmem:[%s0 + $0x18] sm:$0xff]
    %v29 = vld [vmem:[%s0 + $0x20] sm:$0xff]
    %v30 = vld [vmem:[%s0 + $0x28] sm:$0xff]
    %v31 = vld [vmem:[%s0 + $0x30] sm:$0xff]
    %v32 = vld [vmem:[%s0 + $0x38] sm:$0xff]
    %v33 = vld [vmem:[%s1] sm:$0xff]
    %v34 = vld [vmem:[%s1 + $0x8] sm:$0xff]
    %v35 = vld [vmem:[%s3] sm:$0x1]
    %v37 = vlaneseq
    %v38 = vshrl.u32 %v37, 7
    %v39 = vsub.s32 0, %v38
    %v40 = vrot.slane %v35, %v39
    %vm42 = vcmask 130048
    %v44 = vsel %vm42, %v25, 0
    %v47 = vsel %vm42, %v26, 0
    %v50 = vsel %vm42, %v27, 0
    %v53 = vsel %vm42, %v28, 0
    %v56 = vsel %vm42, %v29, 0
    %v59 = vsel %vm42, %v30, 0
    %v62 = vsel %vm42, %v31, 0
    %v65 = vsel %vm42, %v32, 0
    %67 = vmatprep.subr.mxu0 0.0
    %68 = vmatpush1.msra.mxu0 0.0
    %69 = vmatprep.subr.mxu0 0.0
    %70 = vmatpush1.msra.mxu0 0.0
    %71 = vmatprep.subr.mxu0 0.0
    %72 = vmatpush1.msra.mxu0 0.0
    %73 = vmatprep.subr.mxu0 0.0
    %74 = vmatpush1.msra.mxu0 0.0
    %75 = vmatprep.subr.mxu0 0.0
    %76 = vmatpush1.msra.mxu0 0.0
    %77 = vmatprep.subr.mxu0 0.0
    %78 = vmatpush1.msra.mxu0 0.0
    %79 = vmatprep.subr.mxu0 0.0
    %80 = vmatpush1.msra.mxu0 0.0
    %81 = vmatprep.subr.mxu0 0.0
    %82 = vmatpush1.msra.mxu0 0.0
    %83 = vmatprep.subr.mxu0 0.0
    %84 = vmatpush1.msra.mxu0 0.0
    %85 = vmatprep.subr.mxu0 0.0
    %86 = vmatpush1.msra.mxu0 0.0
    %87 = vmatprep.subr.mxu0 0.0
    %88 = vmatpush1.msra.mxu0 0.0
    %89 = vmatprep.subr.mxu0 0.0
    %90 = vmatpush1.msra.mxu0 0.0
    %91 = vmatprep.subr.mxu0 0.0
    %92 = vmatpush1.msra.mxu0 0.0
    %93 = vmatprep.subr.mxu0 0.0
    %94 = vmatpush1.msra.mxu0 0.0
    %95 = vmatprep.subr.mxu0 0.0
    %96 = vmatpush1.msra.mxu0 %v34
    %97 = vmatprep.subr.mxu0 0.0
    %98 = vmatpush1.msra.mxu0 %v33
    %99 = vmatprep.subr.mxu0 0.0
    %100 = vmatpush2.msra.mxu0 0.0
    %101 = vmatprep.subr.mxu0 0.0
    %102 = vmatpush2.msra.mxu0 0.0
    %103 = vmatprep.subr.mxu0 0.0
    %104 = vmatpush2.msra.mxu0 0.0
    %105 = vmatprep.subr.mxu0 0.0
    %106 = vmatpush2.msra.mxu0 0.0
    %107 = vmatprep.subr.mxu0 0.0
    %108 = vmatpush2.msra.mxu0 0.0
    %109 = vmatprep.subr.mxu0 0.0
    %110 = vmatpush2.msra.mxu0 0.0
    %111 = vmatprep.subr.mxu0 0.0
    %112 = vmatpush2.msra.mxu0 0.0
    %113 = vmatprep.subr.mxu0 0.0
    %114 = vmatpush2.msra.mxu0 0.0
    %115 = vmatprep.subr.mxu0 0.0
    %116 = vmatpush2.msra.mxu0 0.0
    %117 = vmatprep.subr.mxu0 0.0
    %118 = vmatpush2.msra.mxu0 0.0
    %119 = vmatprep.subr.mxu0 0.0
    %120 = vmatpush2.msra.mxu0 0.0
    %121 = vmatprep.subr.mxu0 0.0
    %122 = vmatpush2.msra.mxu0 0.0
    %123 = vmatprep.subr.mxu0 0.0
    %124 = vmatpush2.msra.mxu0 0.0
    %125 = vmatprep.subr.mxu0 0.0
    %126 = vmatpush2.msra.mxu0 0.0
    %127 = vmatprep.subr.mxu0 0.0
    %128 = vmatpush2.msra.mxu0 0.0
    %129 = vmatprep.subr.mxu0 0.0
    %130 = vmatpush2.msra.mxu0 0.0
    %131 = vmatprep.mubr.f32.mxu0 0.0
    %132 = vmatmul.mubr.f32.gmra.mxu0 %v44
    %v133 = vpop.f32.mrf.mxu0
    %v134 = vadd.f32 %v40, %v133
    %v135 = vpop.f32.mrf.mxu0
    %136 = vmatprep.mubr.f32.mxu0 0.0
    %137 = vmatmul.mubr.f32.gmra.mxu0 %v47
    %v138 = vpop.f32.mrf.mxu0
    %v139 = vadd.f32 %v40, %v138
    %v140 = vpop.f32.mrf.mxu0
    %141 = vmatprep.mubr.f32.mxu0 0.0
    %142 = vmatmul.mubr.f32.gmra.mxu0 %v50
    %v143 = vpop.f32.mrf.mxu0
    %v144 = vadd.f32 %v40, %v143
    %v145 = vpop.f32.mrf.mxu0
    %146 = vmatprep.mubr.f32.mxu0 0.0
    %147 = vmatmul.mubr.f32.gmra.mxu0 %v53
    %v148 = vpop.f32.mrf.mxu0
    %v149 = vadd.f32 %v40, %v148
    %v150 = vpop.f32.mrf.mxu0
    %151 = vmatprep.mubr.f32.mxu0 0.0
    %152 = vmatmul.mubr.f32.gmra.mxu0 %v56
    %v153 = vpop.f32.mrf.mxu0
    %v154 = vadd.f32 %v40, %v153
    %v155 = vpop.f32.mrf.mxu0
    %156 = vmatprep.mubr.f32.mxu0 0.0
    %157 = vmatmul.mubr.f32.gmra.mxu0 %v59
    %v158 = vpop.f32.mrf.mxu0
    %v159 = vadd.f32 %v40, %v158
    %v160 = vpop.f32.mrf.mxu0
    %161 = vmatprep.mubr.f32.mxu0 0.0
    %162 = vmatmul.mubr.f32.gmra.mxu0 %v62
    %v163 = vpop.f32.mrf.mxu0
    %v164 = vadd.f32 %v40, %v163
    %v165 = vpop.f32.mrf.mxu0
    %166 = vmatprep.mubr.f32.mxu0 0.0
    %167 = vmatmul.mubr.f32.gmra.mxu0 %v65
    %v168 = vpop.f32.mrf.mxu0
    %v169 = vadd.f32 %v40, %v168
    %v170 = vpop.f32.mrf.mxu0
    %171 = vdwg.mxu0
    %v172 = vld [vmem:[%s2] sm:$0xff]
    %v173 = vld [vmem:[%s2 + $0x8] sm:$0xff]
    %v174 = vld [vmem:[%s2 + $0x10] sm:$0xff]
    %v175 = vld [vmem:[%s2 + $0x18] sm:$0xff]
    %v176 = vld [vmem:[%s4] sm:$0x1]
    %v177 = vlaneseq
    %v178 = vand.u32 %v177, 127
    %vm179 = vcmp.ge.s32.totalorder %v178, 64
    %vm180 = vcmp.lt.s32.totalorder %v178, 96
    %vm181 = vmand %vm179, %vm180
    %v182 = vsel %vm181, 1.0, 0.5
    %vm183 = vcmask 261120
    %v185 = vsel %vm183, 0.0, 0
    %187 = vmatprep.subr.mxu0 0.0
    %188 = vmatpush1.msra.mxu0 0.0
    %189 = vmatprep.subr.mxu0 0.0
    %190 = vmatpush1.msra.mxu0 0.0
    %191 = vmatprep.subr.mxu0 0.0
    %192 = vmatpush1.msra.mxu0 0.0
    %193 = vmatprep.subr.mxu0 0.0
    %194 = vmatpush1.msra.mxu0 0.0
    %195 = vmatprep.subr.mxu0 0.0
    %196 = vmatpush1.msra.mxu0 0.0
    %197 = vmatprep.subr.mxu0 0.0
    %198 = vmatpush1.msra.mxu0 0.0
    %199 = vmatprep.subr.mxu0 0.0
    %200 = vmatpush1.msra.mxu0 0.0
    %201 = vmatprep.subr.mxu0 0.0
    %202 = vmatpush1.msra.mxu0 0.0
    %203 = vmatprep.subr.mxu0 0.0
    %204 = vmatpush1.msra.mxu0 0.0
    %205 = vmatprep.subr.mxu0 0.0
    %206 = vmatpush1.msra.mxu0 0.0
    %207 = vmatprep.subr.mxu0 0.0
    %208 = vmatpush1.msra.mxu0 0.0
    %209 = vmatprep.subr.mxu0 0.0
    %210 = vmatpush1.msra.mxu0 0.0
    %211 = vmatprep.subr.mxu0 0.0
    %212 = vmatpush1.msra.mxu0 %v175
    %213 = vmatprep.subr.mxu0 0.0
    %214 = vmatpush1.msra.mxu0 %v174
    %215 = vmatprep.subr.mxu0 0.0
    %216 = vmatpush1.msra.mxu0 %v173
    %217 = vmatprep.subr.mxu0 0.0
    %218 = vmatpush1.msra.mxu0 %v172
    %219 = vmatprep.subr.mxu0 0.0
    %220 = vmatpush2.msra.mxu0 0.0
    %221 = vmatprep.subr.mxu0 0.0
    %222 = vmatpush2.msra.mxu0 0.0
    %223 = vmatprep.subr.mxu0 0.0
    %224 = vmatpush2.msra.mxu0 0.0
    %225 = vmatprep.subr.mxu0 0.0
    %226 = vmatpush2.msra.mxu0 0.0
    %227 = vmatprep.subr.mxu0 0.0
    %228 = vmatpush2.msra.mxu0 0.0
    %229 = vmatprep.subr.mxu0 0.0
    %230 = vmatpush2.msra.mxu0 0.0
    %231 = vmatprep.subr.mxu0 0.0
    %232 = vmatpush2.msra.mxu0 0.0
    %233 = vmatprep.subr.mxu0 0.0
    %234 = vmatpush2.msra.mxu0 0.0
    %235 = vmatprep.subr.mxu0 0.0
    %236 = vmatpush2.msra.mxu0 0.0
    %237 = vmatprep.subr.mxu0 0.0
    %238 = vmatpush2.msra.mxu0 0.0
    %239 = vmatprep.subr.mxu0 0.0
    %240 = vmatpush2.msra.mxu0 0.0
    %241 = vmatprep.subr.mxu0 0.0
    %242 = vmatpush2.msra.mxu0 0.0
    %243 = vmatprep.subr.mxu0 0.0
    %244 = vmatpush2.msra.mxu0 0.0
    %245 = vmatprep.subr.mxu0 0.0
    %246 = vmatpush2.msra.mxu0 0.0
    %247 = vmatprep.subr.mxu0 0.0
    %248 = vmatpush2.msra.mxu0 0.0
    %249 = vmatprep.subr.mxu0 0.0
    %250 = vmatpush2.msra.mxu0 0.0
    %251 = vmatprep.mubr.f32.mxu0 0.0
    %252 = vmatmul.mubr.f32.gmra.mxu0 %v185
    %v253 = vpop.f32.mrf.mxu0
    %v254 = vadd.f32 0.0, %v253
    %v255 = vpop.f32.mrf.mxu0
    %256 = vdwg.mxu0
    %v257 = vadd.f32 %v134, %v254
    %v258 = vmul.f32 %v257, %v182
    %v259 = vtanh.pop %v258
    %v260 = vmul.f32 %v259, 0.5
    %v261 = vadd.f32 %v260, 0.5
    %v262 = vmul.f32 %v261, 0.0
    %264 = vrot.lane.b32.xlu0 %v259, 64
    %v265 = vpop.permute.xlu0 %264
    %v267 = vmul.f32 %v261, %v265
    %269 = vrot.lane.b32.xlu0 %v267, 32
    %v270 = vpop.permute.xlu0 %269
    %v272 = vadd.f32 %v262, %v270
    %v273 = vtanh.pop %v272
    %275 = vrot.lane.b32.xlu0 %v273, 64
    %v276 = vpop.permute.xlu0 %275
    %v278 = vmul.f32 %v261, %v276
    %v280 = vlaneseq
    %v281 = vshrl.u32 %v280, 7
    %v282 = vsub.s32 0, %v281
    %v283 = vrot.slane %v176, %v282
    %284 = vrot.lane.b32.xlu0 %v283, 96
    %v285 = vpop.permute.xlu0 %284
    %v287 = vmul.f32 %v278, %v285
    %289 = vrot.lane.b32.xlu0 %v287, 32
    %v290 = vpop.permute.xlu0 %289
    %v292 = vsel %vm183, %v290, 0.0
    %293 = vadd.xlane.f32.xlu0 %v292
    %v294 = vpop.xlane.xlu0 %293
    %vm295 = vcmp.eq.s32.totalorder %v178, 0
    %v296 = vsel %vm295, 1, 0
    %vm297 = vcmp.eq.s32.totalorder %v296, 1
    %v298 = vsel %vm297, %v294, 0.0
    %300 = vrot.lane.b32.xlu0 %v278, 32
    %v301 = vpop.permute.xlu0 %300
    %v302 = vsel %vm183, %v301, 0
    %304 = vmatprep.subr.mxu0 0.0
    %305 = vmatpush1.msra.mxu0 0.0
    %306 = vmatprep.subr.mxu0 0.0
    %307 = vmatpush1.msra.mxu0 0.0
    %308 = vmatprep.subr.mxu0 0.0
    %309 = vmatpush1.msra.mxu0 0.0
    %310 = vmatprep.subr.mxu0 0.0
    %311 = vmatpush1.msra.mxu0 0.0
    %312 = vmatprep.subr.mxu0 0.0
    %313 = vmatpush1.msra.mxu0 0.0
    %314 = vmatprep.subr.mxu0 0.0
    %315 = vmatpush1.msra.mxu0 0.0
    %316 = vmatprep.subr.mxu0 0.0
    %317 = vmatpush1.msra.mxu0 0.0
    %318 = vmatprep.subr.mxu0 0.0
    %319 = vmatpush1.msra.mxu0 0.0
    %320 = vmatprep.subr.mxu0 0.0
    %321 = vmatpush1.msra.mxu0 0.0
    %322 = vmatprep.subr.mxu0 0.0
    %323 = vmatpush1.msra.mxu0 0.0
    %324 = vmatprep.subr.mxu0 0.0
    %325 = vmatpush1.msra.mxu0 0.0
    %326 = vmatprep.subr.mxu0 0.0
    %327 = vmatpush1.msra.mxu0 0.0
    %328 = vmatprep.subr.mxu0 0.0
    %329 = vmatpush1.msra.mxu0 %v175
    %330 = vmatprep.subr.mxu0 0.0
    %331 = vmatpush1.msra.mxu0 %v174
    %332 = vmatprep.subr.mxu0 0.0
    %333 = vmatpush1.msra.mxu0 %v173
    %334 = vmatprep.subr.mxu0 0.0
    %335 = vmatpush1.msra.mxu0 %v172
    %336 = vmatprep.subr.mxu0 0.0
    %337 = vmatpush2.msra.mxu0 0.0
    %338 = vmatprep.subr.mxu0 0.0
    %339 = vmatpush2.msra.mxu0 0.0
    %340 = vmatprep.subr.mxu0 0.0
    %341 = vmatpush2.msra.mxu0 0.0
    %342 = vmatprep.subr.mxu0 0.0
    %343 = vmatpush2.msra.mxu0 0.0
    %344 = vmatprep.subr.mxu0 0.0
    %345 = vmatpush2.msra.mxu0 0.0
    %346 = vmatprep.subr.mxu0 0.0
    %347 = vmatpush2.msra.mxu0 0.0
    %348 = vmatprep.subr.mxu0 0.0
    %349 = vmatpush2.msra.mxu0 0.0
    %350 = vmatprep.subr.mxu0 0.0
    %351 = vmatpush2.msra.mxu0 0.0
    %352 = vmatprep.subr.mxu0 0.0
    %353 = vmatpush2.msra.mxu0 0.0
    %354 = vmatprep.subr.mxu0 0.0
    %355 = vmatpush2.msra.mxu0 0.0
    %356 = vmatprep.subr.mxu0 0.0
    %357 = vmatpush2.msra.mxu0 0.0
    %358 = vmatprep.subr.mxu0 0.0
    %359 = vmatpush2.msra.mxu0 0.0
    %360 = vmatprep.subr.mxu0 0.0
    %361 = vmatpush2.msra.mxu0 0.0
    %362 = vmatprep.subr.mxu0 0.0
    %363 = vmatpush2.msra.mxu0 0.0
    %364 = vmatprep.subr.mxu0 0.0
    %365 = vmatpush2.msra.mxu0 0.0
    %366 = vmatprep.subr.mxu0 0.0
    %367 = vmatpush2.msra.mxu0 0.0
    %368 = vmatprep.mubr.f32.mxu0 0.0
    %369 = vmatmul.mubr.f32.gmra.mxu0 %v302
    %v370 = vpop.f32.mrf.mxu0
    %v371 = vadd.f32 0.0, %v370
    %v372 = vpop.f32.mrf.mxu0
    %373 = vdwg.mxu0
    %v374 = vadd.f32 %v139, %v371
    %v375 = vmul.f32 %v374, %v182
    %v376 = vtanh.pop %v375
    %v377 = vmul.f32 %v376, 0.5
    %v378 = vadd.f32 %v377, 0.5
    %v379 = vmul.f32 %v378, %v272
    %381 = vrot.lane.b32.xlu0 %v376, 64
    %v382 = vpop.permute.xlu0 %381
    %v384 = vmul.f32 %v378, %v382
    %386 = vrot.lane.b32.xlu0 %v384, 32
    %v387 = vpop.permute.xlu0 %386
    %v389 = vadd.f32 %v379, %v387
    %v390 = vtanh.pop %v389
    %392 = vrot.lane.b32.xlu0 %v390, 64
    %v393 = vpop.permute.xlu0 %392
    %v395 = vmul.f32 %v378, %v393
    %v396 = vmul.f32 %v395, %v285
    %398 = vrot.lane.b32.xlu0 %v396, 32
    %v399 = vpop.permute.xlu0 %398
    %v401 = vsel %vm183, %v399, 0.0
    %402 = vadd.xlane.f32.xlu0 %v401
    %v403 = vpop.xlane.xlu0 %402
    %vm404 = vcmp.eq.s32.totalorder %v178, 1
    %v405 = vsel %vm404, 1, 0
    %vm406 = vcmp.eq.s32.totalorder %v405, 1
    %v407 = vsel %vm406, %v403, %v298
    %409 = vrot.lane.b32.xlu0 %v395, 32
    %v410 = vpop.permute.xlu0 %409
    %v411 = vsel %vm183, %v410, 0
    %413 = vmatprep.subr.mxu0 0.0
    %414 = vmatpush1.msra.mxu0 0.0
    %415 = vmatprep.subr.mxu0 0.0
    %416 = vmatpush1.msra.mxu0 0.0
    %417 = vmatprep.subr.mxu0 0.0
    %418 = vmatpush1.msra.mxu0 0.0
    %419 = vmatprep.subr.mxu0 0.0
    %420 = vmatpush1.msra.mxu0 0.0
    %421 = vmatprep.subr.mxu0 0.0
    %422 = vmatpush1.msra.mxu0 0.0
    %423 = vmatprep.subr.mxu0 0.0
    %424 = vmatpush1.msra.mxu0 0.0
    %425 = vmatprep.subr.mxu0 0.0
    %426 = vmatpush1.msra.mxu0 0.0
    %427 = vmatprep.subr.mxu0 0.0
    %428 = vmatpush1.msra.mxu0 0.0
    %429 = vmatprep.subr.mxu0 0.0
    %430 = vmatpush1.msra.mxu0 0.0
    %431 = vmatprep.subr.mxu0 0.0
    %432 = vmatpush1.msra.mxu0 0.0
    %433 = vmatprep.subr.mxu0 0.0
    %434 = vmatpush1.msra.mxu0 0.0
    %435 = vmatprep.subr.mxu0 0.0
    %436 = vmatpush1.msra.mxu0 0.0
    %437 = vmatprep.subr.mxu0 0.0
    %438 = vmatpush1.msra.mxu0 %v175
    %439 = vmatprep.subr.mxu0 0.0
    %440 = vmatpush1.msra.mxu0 %v174
    %441 = vmatprep.subr.mxu0 0.0
    %442 = vmatpush1.msra.mxu0 %v173
    %443 = vmatprep.subr.mxu0 0.0
    %444 = vmatpush1.msra.mxu0 %v172
    %445 = vmatprep.subr.mxu0 0.0
    %446 = vmatpush2.msra.mxu0 0.0
    %447 = vmatprep.subr.mxu0 0.0
    %448 = vmatpush2.msra.mxu0 0.0
    %449 = vmatprep.subr.mxu0 0.0
    %450 = vmatpush2.msra.mxu0 0.0
    %451 = vmatprep.subr.mxu0 0.0
    %452 = vmatpush2.msra.mxu0 0.0
    %453 = vmatprep.subr.mxu0 0.0
    %454 = vmatpush2.msra.mxu0 0.0
    %455 = vmatprep.subr.mxu0 0.0
    %456 = vmatpush2.msra.mxu0 0.0
    %457 = vmatprep.subr.mxu0 0.0
    %458 = vmatpush2.msra.mxu0 0.0
    %459 = vmatprep.subr.mxu0 0.0
    %460 = vmatpush2.msra.mxu0 0.0
    %461 = vmatprep.subr.mxu0 0.0
    %462 = vmatpush2.msra.mxu0 0.0
    %463 = vmatprep.subr.mxu0 0.0
    %464 = vmatpush2.msra.mxu0 0.0
    %465 = vmatprep.subr.mxu0 0.0
    %466 = vmatpush2.msra.mxu0 0.0
    %467 = vmatprep.subr.mxu0 0.0
    %468 = vmatpush2.msra.mxu0 0.0
    %469 = vmatprep.subr.mxu0 0.0
    %470 = vmatpush2.msra.mxu0 0.0
    %471 = vmatprep.subr.mxu0 0.0
    %472 = vmatpush2.msra.mxu0 0.0
    %473 = vmatprep.subr.mxu0 0.0
    %474 = vmatpush2.msra.mxu0 0.0
    %475 = vmatprep.subr.mxu0 0.0
    %476 = vmatpush2.msra.mxu0 0.0
    %477 = vmatprep.mubr.f32.mxu0 0.0
    %478 = vmatmul.mubr.f32.gmra.mxu0 %v411
    %v479 = vpop.f32.mrf.mxu0
    %v480 = vadd.f32 0.0, %v479
    %v481 = vpop.f32.mrf.mxu0
    %482 = vdwg.mxu0
    %v483 = vadd.f32 %v144, %v480
    %v484 = vmul.f32 %v483, %v182
    %v485 = vtanh.pop %v484
    %v486 = vmul.f32 %v485, 0.5
    %v487 = vadd.f32 %v486, 0.5
    %v488 = vmul.f32 %v487, %v389
    %490 = vrot.lane.b32.xlu0 %v485, 64
    %v491 = vpop.permute.xlu0 %490
    %v493 = vmul.f32 %v487, %v491
    %495 = vrot.lane.b32.xlu0 %v493, 32
    %v496 = vpop.permute.xlu0 %495
    %v498 = vadd.f32 %v488, %v496
    %v499 = vtanh.pop %v498
    %501 = vrot.lane.b32.xlu0 %v499, 64
    %v502 = vpop.permute.xlu0 %501
    %v504 = vmul.f32 %v487, %v502
    %v505 = vmul.f32 %v504, %v285
    %507 = vrot.lane.b32.xlu0 %v505, 32
    %v508 = vpop.permute.xlu0 %507
    %v510 = vsel %vm183, %v508, 0.0
    %511 = vadd.xlane.f32.xlu0 %v510
    %v512 = vpop.xlane.xlu0 %511
    %vm513 = vcmp.eq.s32.totalorder %v178, 2
    %v514 = vsel %vm513, 1, 0
    %vm515 = vcmp.eq.s32.totalorder %v514, 1
    %v516 = vsel %vm515, %v512, %v407
    %518 = vrot.lane.b32.xlu0 %v504, 32
    %v519 = vpop.permute.xlu0 %518
    %v520 = vsel %vm183, %v519, 0
    %522 = vmatprep.subr.mxu0 0.0
    %523 = vmatpush1.msra.mxu0 0.0
    %524 = vmatprep.subr.mxu0 0.0
    %525 = vmatpush1.msra.mxu0 0.0
    %526 = vmatprep.subr.mxu0 0.0
    %527 = vmatpush1.msra.mxu0 0.0
    %528 = vmatprep.subr.mxu0 0.0
    %529 = vmatpush1.msra.mxu0 0.0
    %530 = vmatprep.subr.mxu0 0.0
    %531 = vmatpush1.msra.mxu0 0.0
    %532 = vmatprep.subr.mxu0 0.0
    %533 = vmatpush1.msra.mxu0 0.0
    %534 = vmatprep.subr.mxu0 0.0
    %535 = vmatpush1.msra.mxu0 0.0
    %536 = vmatprep.subr.mxu0 0.0
    %537 = vmatpush1.msra.mxu0 0.0
    %538 = vmatprep.subr.mxu0 0.0
    %539 = vmatpush1.msra.mxu0 0.0
    %540 = vmatprep.subr.mxu0 0.0
    %541 = vmatpush1.msra.mxu0 0.0
    %542 = vmatprep.subr.mxu0 0.0
    %543 = vmatpush1.msra.mxu0 0.0
    %544 = vmatprep.subr.mxu0 0.0
    %545 = vmatpush1.msra.mxu0 0.0
    %546 = vmatprep.subr.mxu0 0.0
    %547 = vmatpush1.msra.mxu0 %v175
    %548 = vmatprep.subr.mxu0 0.0
    %549 = vmatpush1.msra.mxu0 %v174
    %550 = vmatprep.subr.mxu0 0.0
    %551 = vmatpush1.msra.mxu0 %v173
    %552 = vmatprep.subr.mxu0 0.0
    %553 = vmatpush1.msra.mxu0 %v172
    %554 = vmatprep.subr.mxu0 0.0
    %555 = vmatpush2.msra.mxu0 0.0
    %556 = vmatprep.subr.mxu0 0.0
    %557 = vmatpush2.msra.mxu0 0.0
    %558 = vmatprep.subr.mxu0 0.0
    %559 = vmatpush2.msra.mxu0 0.0
    %560 = vmatprep.subr.mxu0 0.0
    %561 = vmatpush2.msra.mxu0 0.0
    %562 = vmatprep.subr.mxu0 0.0
    %563 = vmatpush2.msra.mxu0 0.0
    %564 = vmatprep.subr.mxu0 0.0
    %565 = vmatpush2.msra.mxu0 0.0
    %566 = vmatprep.subr.mxu0 0.0
    %567 = vmatpush2.msra.mxu0 0.0
    %568 = vmatprep.subr.mxu0 0.0
    %569 = vmatpush2.msra.mxu0 0.0
    %570 = vmatprep.subr.mxu0 0.0
    %571 = vmatpush2.msra.mxu0 0.0
    %572 = vmatprep.subr.mxu0 0.0
    %573 = vmatpush2.msra.mxu0 0.0
    %574 = vmatprep.subr.mxu0 0.0
    %575 = vmatpush2.msra.mxu0 0.0
    %576 = vmatprep.subr.mxu0 0.0
    %577 = vmatpush2.msra.mxu0 0.0
    %578 = vmatprep.subr.mxu0 0.0
    %579 = vmatpush2.msra.mxu0 0.0
    %580 = vmatprep.subr.mxu0 0.0
    %581 = vmatpush2.msra.mxu0 0.0
    %582 = vmatprep.subr.mxu0 0.0
    %583 = vmatpush2.msra.mxu0 0.0
    %584 = vmatprep.subr.mxu0 0.0
    %585 = vmatpush2.msra.mxu0 0.0
    %586 = vmatprep.mubr.f32.mxu0 0.0
    %587 = vmatmul.mubr.f32.gmra.mxu0 %v520
    %v588 = vpop.f32.mrf.mxu0
    %v589 = vadd.f32 0.0, %v588
    %v590 = vpop.f32.mrf.mxu0
    %591 = vdwg.mxu0
    %v592 = vadd.f32 %v149, %v589
    %v593 = vmul.f32 %v592, %v182
    %v594 = vtanh.pop %v593
    %v595 = vmul.f32 %v594, 0.5
    %v596 = vadd.f32 %v595, 0.5
    %v597 = vmul.f32 %v596, %v498
    %599 = vrot.lane.b32.xlu0 %v594, 64
    %v600 = vpop.permute.xlu0 %599
    %v602 = vmul.f32 %v596, %v600
    %604 = vrot.lane.b32.xlu0 %v602, 32
    %v605 = vpop.permute.xlu0 %604
    %v607 = vadd.f32 %v597, %v605
    %v608 = vtanh.pop %v607
    %610 = vrot.lane.b32.xlu0 %v608, 64
    %v611 = vpop.permute.xlu0 %610
    %v613 = vmul.f32 %v596, %v611
    %v614 = vmul.f32 %v613, %v285
    %616 = vrot.lane.b32.xlu0 %v614, 32
    %v617 = vpop.permute.xlu0 %616
    %v619 = vsel %vm183, %v617, 0.0
    %620 = vadd.xlane.f32.xlu0 %v619
    %v621 = vpop.xlane.xlu0 %620
    %vm622 = vcmp.eq.s32.totalorder %v178, 3
    %v623 = vsel %vm622, 1, 0
    %vm624 = vcmp.eq.s32.totalorder %v623, 1
    %v625 = vsel %vm624, %v621, %v516
    %627 = vrot.lane.b32.xlu0 %v613, 32
    %v628 = vpop.permute.xlu0 %627
    %v629 = vsel %vm183, %v628, 0
    %631 = vmatprep.subr.mxu0 0.0
    %632 = vmatpush1.msra.mxu0 0.0
    %633 = vmatprep.subr.mxu0 0.0
    %634 = vmatpush1.msra.mxu0 0.0
    %635 = vmatprep.subr.mxu0 0.0
    %636 = vmatpush1.msra.mxu0 0.0
    %637 = vmatprep.subr.mxu0 0.0
    %638 = vmatpush1.msra.mxu0 0.0
    %639 = vmatprep.subr.mxu0 0.0
    %640 = vmatpush1.msra.mxu0 0.0
    %641 = vmatprep.subr.mxu0 0.0
    %642 = vmatpush1.msra.mxu0 0.0
    %643 = vmatprep.subr.mxu0 0.0
    %644 = vmatpush1.msra.mxu0 0.0
    %645 = vmatprep.subr.mxu0 0.0
    %646 = vmatpush1.msra.mxu0 0.0
    %647 = vmatprep.subr.mxu0 0.0
    %648 = vmatpush1.msra.mxu0 0.0
    %649 = vmatprep.subr.mxu0 0.0
    %650 = vmatpush1.msra.mxu0 0.0
    %651 = vmatprep.subr.mxu0 0.0
    %652 = vmatpush1.msra.mxu0 0.0
    %653 = vmatprep.subr.mxu0 0.0
    %654 = vmatpush1.msra.mxu0 0.0
    %655 = vmatprep.subr.mxu0 0.0
    %656 = vmatpush1.msra.mxu0 %v175
    %657 = vmatprep.subr.mxu0 0.0
    %658 = vmatpush1.msra.mxu0 %v174
    %659 = vmatprep.subr.mxu0 0.0
    %660 = vmatpush1.msra.mxu0 %v173
    %661 = vmatprep.subr.mxu0 0.0
    %662 = vmatpush1.msra.mxu0 %v172
    %663 = vmatprep.subr.mxu0 0.0
    %664 = vmatpush2.msra.mxu0 0.0
    %665 = vmatprep.subr.mxu0 0.0
    %666 = vmatpush2.msra.mxu0 0.0
    %667 = vmatprep.subr.mxu0 0.0
    %668 = vmatpush2.msra.mxu0 0.0
    %669 = vmatprep.subr.mxu0 0.0
    %670 = vmatpush2.msra.mxu0 0.0
    %671 = vmatprep.subr.mxu0 0.0
    %672 = vmatpush2.msra.mxu0 0.0
    %673 = vmatprep.subr.mxu0 0.0
    %674 = vmatpush2.msra.mxu0 0.0
    %675 = vmatprep.subr.mxu0 0.0
    %676 = vmatpush2.msra.mxu0 0.0
    %677 = vmatprep.subr.mxu0 0.0
    %678 = vmatpush2.msra.mxu0 0.0
    %679 = vmatprep.subr.mxu0 0.0
    %680 = vmatpush2.msra.mxu0 0.0
    %681 = vmatprep.subr.mxu0 0.0
    %682 = vmatpush2.msra.mxu0 0.0
    %683 = vmatprep.subr.mxu0 0.0
    %684 = vmatpush2.msra.mxu0 0.0
    %685 = vmatprep.subr.mxu0 0.0
    %686 = vmatpush2.msra.mxu0 0.0
    %687 = vmatprep.subr.mxu0 0.0
    %688 = vmatpush2.msra.mxu0 0.0
    %689 = vmatprep.subr.mxu0 0.0
    %690 = vmatpush2.msra.mxu0 0.0
    %691 = vmatprep.subr.mxu0 0.0
    %692 = vmatpush2.msra.mxu0 0.0
    %693 = vmatprep.subr.mxu0 0.0
    %694 = vmatpush2.msra.mxu0 0.0
    %695 = vmatprep.mubr.f32.mxu0 0.0
    %696 = vmatmul.mubr.f32.gmra.mxu0 %v629
    %v697 = vpop.f32.mrf.mxu0
    %v698 = vadd.f32 0.0, %v697
    %v699 = vpop.f32.mrf.mxu0
    %700 = vdwg.mxu0
    %v701 = vadd.f32 %v154, %v698
    %v702 = vmul.f32 %v701, %v182
    %v703 = vtanh.pop %v702
    %v704 = vmul.f32 %v703, 0.5
    %v705 = vadd.f32 %v704, 0.5
    %v706 = vmul.f32 %v705, %v607
    %708 = vrot.lane.b32.xlu0 %v703, 64
    %v709 = vpop.permute.xlu0 %708
    %v711 = vmul.f32 %v705, %v709
    %713 = vrot.lane.b32.xlu0 %v711, 32
    %v714 = vpop.permute.xlu0 %713
    %v716 = vadd.f32 %v706, %v714
    %v717 = vtanh.pop %v716
    %719 = vrot.lane.b32.xlu0 %v717, 64
    %v720 = vpop.permute.xlu0 %719
    %v722 = vmul.f32 %v705, %v720
    %v723 = vmul.f32 %v722, %v285
    %725 = vrot.lane.b32.xlu0 %v723, 32
    %v726 = vpop.permute.xlu0 %725
    %v728 = vsel %vm183, %v726, 0.0
    %729 = vadd.xlane.f32.xlu0 %v728
    %v730 = vpop.xlane.xlu0 %729
    %vm731 = vcmp.eq.s32.totalorder %v178, 4
    %v732 = vsel %vm731, 1, 0
    %vm733 = vcmp.eq.s32.totalorder %v732, 1
    %v734 = vsel %vm733, %v730, %v625
    %736 = vrot.lane.b32.xlu0 %v722, 32
    %v737 = vpop.permute.xlu0 %736
    %v738 = vsel %vm183, %v737, 0
    %740 = vmatprep.subr.mxu0 0.0
    %741 = vmatpush1.msra.mxu0 0.0
    %742 = vmatprep.subr.mxu0 0.0
    %743 = vmatpush1.msra.mxu0 0.0
    %744 = vmatprep.subr.mxu0 0.0
    %745 = vmatpush1.msra.mxu0 0.0
    %746 = vmatprep.subr.mxu0 0.0
    %747 = vmatpush1.msra.mxu0 0.0
    %748 = vmatprep.subr.mxu0 0.0
    %749 = vmatpush1.msra.mxu0 0.0
    %750 = vmatprep.subr.mxu0 0.0
    %751 = vmatpush1.msra.mxu0 0.0
    %752 = vmatprep.subr.mxu0 0.0
    %753 = vmatpush1.msra.mxu0 0.0
    %754 = vmatprep.subr.mxu0 0.0
    %755 = vmatpush1.msra.mxu0 0.0
    %756 = vmatprep.subr.mxu0 0.0
    %757 = vmatpush1.msra.mxu0 0.0
    %758 = vmatprep.subr.mxu0 0.0
    %759 = vmatpush1.msra.mxu0 0.0
    %760 = vmatprep.subr.mxu0 0.0
    %761 = vmatpush1.msra.mxu0 0.0
    %762 = vmatprep.subr.mxu0 0.0
    %763 = vmatpush1.msra.mxu0 0.0
    %764 = vmatprep.subr.mxu0 0.0
    %765 = vmatpush1.msra.mxu0 %v175
    %766 = vmatprep.subr.mxu0 0.0
    %767 = vmatpush1.msra.mxu0 %v174
    %768 = vmatprep.subr.mxu0 0.0
    %769 = vmatpush1.msra.mxu0 %v173
    %770 = vmatprep.subr.mxu0 0.0
    %771 = vmatpush1.msra.mxu0 %v172
    %772 = vmatprep.subr.mxu0 0.0
    %773 = vmatpush2.msra.mxu0 0.0
    %774 = vmatprep.subr.mxu0 0.0
    %775 = vmatpush2.msra.mxu0 0.0
    %776 = vmatprep.subr.mxu0 0.0
    %777 = vmatpush2.msra.mxu0 0.0
    %778 = vmatprep.subr.mxu0 0.0
    %779 = vmatpush2.msra.mxu0 0.0
    %780 = vmatprep.subr.mxu0 0.0
    %781 = vmatpush2.msra.mxu0 0.0
    %782 = vmatprep.subr.mxu0 0.0
    %783 = vmatpush2.msra.mxu0 0.0
    %784 = vmatprep.subr.mxu0 0.0
    %785 = vmatpush2.msra.mxu0 0.0
    %786 = vmatprep.subr.mxu0 0.0
    %787 = vmatpush2.msra.mxu0 0.0
    %788 = vmatprep.subr.mxu0 0.0
    %789 = vmatpush2.msra.mxu0 0.0
    %790 = vmatprep.subr.mxu0 0.0
    %791 = vmatpush2.msra.mxu0 0.0
    %792 = vmatprep.subr.mxu0 0.0
    %793 = vmatpush2.msra.mxu0 0.0
    %794 = vmatprep.subr.mxu0 0.0
    %795 = vmatpush2.msra.mxu0 0.0
    %796 = vmatprep.subr.mxu0 0.0
    %797 = vmatpush2.msra.mxu0 0.0
    %798 = vmatprep.subr.mxu0 0.0
    %799 = vmatpush2.msra.mxu0 0.0
    %800 = vmatprep.subr.mxu0 0.0
    %801 = vmatpush2.msra.mxu0 0.0
    %802 = vmatprep.subr.mxu0 0.0
    %803 = vmatpush2.msra.mxu0 0.0
    %804 = vmatprep.mubr.f32.mxu0 0.0
    %805 = vmatmul.mubr.f32.gmra.mxu0 %v738
    %v806 = vpop.f32.mrf.mxu0
    %v807 = vadd.f32 0.0, %v806
    %v808 = vpop.f32.mrf.mxu0
    %809 = vdwg.mxu0
    %v810 = vadd.f32 %v159, %v807
    %v811 = vmul.f32 %v810, %v182
    %v812 = vtanh.pop %v811
    %v813 = vmul.f32 %v812, 0.5
    %v814 = vadd.f32 %v813, 0.5
    %v815 = vmul.f32 %v814, %v716
    %817 = vrot.lane.b32.xlu0 %v812, 64
    %v818 = vpop.permute.xlu0 %817
    %v820 = vmul.f32 %v814, %v818
    %822 = vrot.lane.b32.xlu0 %v820, 32
    %v823 = vpop.permute.xlu0 %822
    %v825 = vadd.f32 %v815, %v823
    %v826 = vtanh.pop %v825
    %828 = vrot.lane.b32.xlu0 %v826, 64
    %v829 = vpop.permute.xlu0 %828
    %v831 = vmul.f32 %v814, %v829
    %v832 = vmul.f32 %v831, %v285
    %834 = vrot.lane.b32.xlu0 %v832, 32
    %v835 = vpop.permute.xlu0 %834
    %v837 = vsel %vm183, %v835, 0.0
    %838 = vadd.xlane.f32.xlu0 %v837
    %v839 = vpop.xlane.xlu0 %838
    %vm840 = vcmp.eq.s32.totalorder %v178, 5
    %v841 = vsel %vm840, 1, 0
    %vm842 = vcmp.eq.s32.totalorder %v841, 1
    %v843 = vsel %vm842, %v839, %v734
    %845 = vrot.lane.b32.xlu0 %v831, 32
    %v846 = vpop.permute.xlu0 %845
    %v847 = vsel %vm183, %v846, 0
    %849 = vmatprep.subr.mxu0 0.0
    %850 = vmatpush1.msra.mxu0 0.0
    %851 = vmatprep.subr.mxu0 0.0
    %852 = vmatpush1.msra.mxu0 0.0
    %853 = vmatprep.subr.mxu0 0.0
    %854 = vmatpush1.msra.mxu0 0.0
    %855 = vmatprep.subr.mxu0 0.0
    %856 = vmatpush1.msra.mxu0 0.0
    %857 = vmatprep.subr.mxu0 0.0
    %858 = vmatpush1.msra.mxu0 0.0
    %859 = vmatprep.subr.mxu0 0.0
    %860 = vmatpush1.msra.mxu0 0.0
    %861 = vmatprep.subr.mxu0 0.0
    %862 = vmatpush1.msra.mxu0 0.0
    %863 = vmatprep.subr.mxu0 0.0
    %864 = vmatpush1.msra.mxu0 0.0
    %865 = vmatprep.subr.mxu0 0.0
    %866 = vmatpush1.msra.mxu0 0.0
    %867 = vmatprep.subr.mxu0 0.0
    %868 = vmatpush1.msra.mxu0 0.0
    %869 = vmatprep.subr.mxu0 0.0
    %870 = vmatpush1.msra.mxu0 0.0
    %871 = vmatprep.subr.mxu0 0.0
    %872 = vmatpush1.msra.mxu0 0.0
    %873 = vmatprep.subr.mxu0 0.0
    %874 = vmatpush1.msra.mxu0 %v175
    %875 = vmatprep.subr.mxu0 0.0
    %876 = vmatpush1.msra.mxu0 %v174
    %877 = vmatprep.subr.mxu0 0.0
    %878 = vmatpush1.msra.mxu0 %v173
    %879 = vmatprep.subr.mxu0 0.0
    %880 = vmatpush1.msra.mxu0 %v172
    %881 = vmatprep.subr.mxu0 0.0
    %882 = vmatpush2.msra.mxu0 0.0
    %883 = vmatprep.subr.mxu0 0.0
    %884 = vmatpush2.msra.mxu0 0.0
    %885 = vmatprep.subr.mxu0 0.0
    %886 = vmatpush2.msra.mxu0 0.0
    %887 = vmatprep.subr.mxu0 0.0
    %888 = vmatpush2.msra.mxu0 0.0
    %889 = vmatprep.subr.mxu0 0.0
    %890 = vmatpush2.msra.mxu0 0.0
    %891 = vmatprep.subr.mxu0 0.0
    %892 = vmatpush2.msra.mxu0 0.0
    %893 = vmatprep.subr.mxu0 0.0
    %894 = vmatpush2.msra.mxu0 0.0
    %895 = vmatprep.subr.mxu0 0.0
    %896 = vmatpush2.msra.mxu0 0.0
    %897 = vmatprep.subr.mxu0 0.0
    %898 = vmatpush2.msra.mxu0 0.0
    %899 = vmatprep.subr.mxu0 0.0
    %900 = vmatpush2.msra.mxu0 0.0
    %901 = vmatprep.subr.mxu0 0.0
    %902 = vmatpush2.msra.mxu0 0.0
    %903 = vmatprep.subr.mxu0 0.0
    %904 = vmatpush2.msra.mxu0 0.0
    %905 = vmatprep.subr.mxu0 0.0
    %906 = vmatpush2.msra.mxu0 0.0
    %907 = vmatprep.subr.mxu0 0.0
    %908 = vmatpush2.msra.mxu0 0.0
    %909 = vmatprep.subr.mxu0 0.0
    %910 = vmatpush2.msra.mxu0 0.0
    %911 = vmatprep.subr.mxu0 0.0
    %912 = vmatpush2.msra.mxu0 0.0
    %913 = vmatprep.mubr.f32.mxu0 0.0
    %914 = vmatmul.mubr.f32.gmra.mxu0 %v847
    %v915 = vpop.f32.mrf.mxu0
    %v916 = vadd.f32 0.0, %v915
    %v917 = vpop.f32.mrf.mxu0
    %918 = vdwg.mxu0
    %v919 = vadd.f32 %v164, %v916
    %v920 = vmul.f32 %v919, %v182
    %v921 = vtanh.pop %v920
    %v922 = vmul.f32 %v921, 0.5
    %v923 = vadd.f32 %v922, 0.5
    %v924 = vmul.f32 %v923, %v825
    %926 = vrot.lane.b32.xlu0 %v921, 64
    %v927 = vpop.permute.xlu0 %926
    %v929 = vmul.f32 %v923, %v927
    %931 = vrot.lane.b32.xlu0 %v929, 32
    %v932 = vpop.permute.xlu0 %931
    %v934 = vadd.f32 %v924, %v932
    %v935 = vtanh.pop %v934
    %937 = vrot.lane.b32.xlu0 %v935, 64
    %v938 = vpop.permute.xlu0 %937
    %v940 = vmul.f32 %v923, %v938
    %v941 = vmul.f32 %v940, %v285
    %943 = vrot.lane.b32.xlu0 %v941, 32
    %v944 = vpop.permute.xlu0 %943
    %v946 = vsel %vm183, %v944, 0.0
    %947 = vadd.xlane.f32.xlu0 %v946
    %v948 = vpop.xlane.xlu0 %947
    %vm949 = vcmp.eq.s32.totalorder %v178, 6
    %v950 = vsel %vm949, 1, 0
    %vm951 = vcmp.eq.s32.totalorder %v950, 1
    %v952 = vsel %vm951, %v948, %v843
    %954 = vrot.lane.b32.xlu0 %v940, 32
    %v955 = vpop.permute.xlu0 %954
    %v956 = vsel %vm183, %v955, 0
    %958 = vmatprep.subr.mxu0 0.0
    %959 = vmatpush1.msra.mxu0 0.0
    %960 = vmatprep.subr.mxu0 0.0
    %961 = vmatpush1.msra.mxu0 0.0
    %962 = vmatprep.subr.mxu0 0.0
    %963 = vmatpush1.msra.mxu0 0.0
    %964 = vmatprep.subr.mxu0 0.0
    %965 = vmatpush1.msra.mxu0 0.0
    %966 = vmatprep.subr.mxu0 0.0
    %967 = vmatpush1.msra.mxu0 0.0
    %968 = vmatprep.subr.mxu0 0.0
    %969 = vmatpush1.msra.mxu0 0.0
    %970 = vmatprep.subr.mxu0 0.0
    %971 = vmatpush1.msra.mxu0 0.0
    %972 = vmatprep.subr.mxu0 0.0
    %973 = vmatpush1.msra.mxu0 0.0
    %974 = vmatprep.subr.mxu0 0.0
    %975 = vmatpush1.msra.mxu0 0.0
    %976 = vmatprep.subr.mxu0 0.0
    %977 = vmatpush1.msra.mxu0 0.0
    %978 = vmatprep.subr.mxu0 0.0
    %979 = vmatpush1.msra.mxu0 0.0
    %980 = vmatprep.subr.mxu0 0.0
    %981 = vmatpush1.msra.mxu0 0.0
    %982 = vmatprep.subr.mxu0 0.0
    %983 = vmatpush1.msra.mxu0 %v175
    %984 = vmatprep.subr.mxu0 0.0
    %985 = vmatpush1.msra.mxu0 %v174
    %986 = vmatprep.subr.mxu0 0.0
    %987 = vmatpush1.msra.mxu0 %v173
    %988 = vmatprep.subr.mxu0 0.0
    %989 = vmatpush1.msra.mxu0 %v172
    %990 = vmatprep.subr.mxu0 0.0
    %991 = vmatpush2.msra.mxu0 0.0
    %992 = vmatprep.subr.mxu0 0.0
    %993 = vmatpush2.msra.mxu0 0.0
    %994 = vmatprep.subr.mxu0 0.0
    %995 = vmatpush2.msra.mxu0 0.0
    %996 = vmatprep.subr.mxu0 0.0
    %997 = vmatpush2.msra.mxu0 0.0
    %998 = vmatprep.subr.mxu0 0.0
    %999 = vmatpush2.msra.mxu0 0.0
    %1000 = vmatprep.subr.mxu0 0.0
    %1001 = vmatpush2.msra.mxu0 0.0
    %1002 = vmatprep.subr.mxu0 0.0
    %1003 = vmatpush2.msra.mxu0 0.0
    %1004 = vmatprep.subr.mxu0 0.0
    %1005 = vmatpush2.msra.mxu0 0.0
    %1006 = vmatprep.subr.mxu0 0.0
    %1007 = vmatpush2.msra.mxu0 0.0
    %1008 = vmatprep.subr.mxu0 0.0
    %1009 = vmatpush2.msra.mxu0 0.0
    %1010 = vmatprep.subr.mxu0 0.0
    %1011 = vmatpush2.msra.mxu0 0.0
    %1012 = vmatprep.subr.mxu0 0.0
    %1013 = vmatpush2.msra.mxu0 0.0
    %1014 = vmatprep.subr.mxu0 0.0
    %1015 = vmatpush2.msra.mxu0 0.0
    %1016 = vmatprep.subr.mxu0 0.0
    %1017 = vmatpush2.msra.mxu0 0.0
    %1018 = vmatprep.subr.mxu0 0.0
    %1019 = vmatpush2.msra.mxu0 0.0
    %1020 = vmatprep.subr.mxu0 0.0
    %1021 = vmatpush2.msra.mxu0 0.0
    %1022 = vmatprep.mubr.f32.mxu0 0.0
    %1023 = vmatmul.mubr.f32.gmra.mxu0 %v956
    %v1024 = vpop.f32.mrf.mxu0
    %v1025 = vadd.f32 0.0, %v1024
    %v1026 = vpop.f32.mrf.mxu0
    %1027 = vdwg.mxu0
    %v1028 = vadd.f32 %v169, %v1025
    %v1029 = vmul.f32 %v1028, %v182
    %v1030 = vtanh.pop %v1029
    %v1031 = vmul.f32 %v1030, 0.5
    %v1032 = vadd.f32 %v1031, 0.5
    %v1033 = vmul.f32 %v1032, %v934
    %1035 = vrot.lane.b32.xlu0 %v1030, 64
    %v1036 = vpop.permute.xlu0 %1035
    %v1038 = vmul.f32 %v1032, %v1036
    %1040 = vrot.lane.b32.xlu0 %v1038, 32
    %v1041 = vpop.permute.xlu0 %1040
    %v1043 = vadd.f32 %v1033, %v1041
    %v1044 = vtanh.pop %v1043
    %1046 = vrot.lane.b32.xlu0 %v1044, 64
    %v1047 = vpop.permute.xlu0 %1046
    %v1049 = vmul.f32 %v1032, %v1047
    %v1050 = vmul.f32 %v1049, %v285
    %1052 = vrot.lane.b32.xlu0 %v1050, 32
    %v1053 = vpop.permute.xlu0 %1052
    %v1055 = vsel %vm183, %v1053, 0.0
    %1056 = vadd.xlane.f32.xlu0 %v1055
    %v1057 = vpop.xlane.xlu0 %1056
    %vm1058 = vcmp.eq.s32.totalorder %v178, 7
    %v1059 = vsel %vm1058, 1, 0
    %vm1060 = vcmp.eq.s32.totalorder %v1059, 1
    %v1061 = vsel %vm1060, %v1057, %v952
    %s1062 = sld [smem:[#allocation2]]
    %v1063 = vstv %s1062
    %v1064 = vadd.f32 %v1061, %v1063
    %vm1065 = vcmp.gt.f32.partialorder %v1064, 0.0
    %v1066 = vmin.f32 %v1064, 0.0
    %v1067 = vmul.f32 %v1066, 1.442695
    %v1068 = vpow.pop %v1067
    %v1069 = vsub.f32 %v1068, 1.0
    %v1070 = vmul.f32 %v1069, 1.6732632
    %v1071 = vsel %vm1065, %v1064, %v1070
    %v1072 = vmul.f32 %v1071, 1.050701
    %vm1073 = vcmask 64512
    %1074 = vst.msk [vmem:[#allocation3] sm:$0xff] %vm1073, %v1072
    // Predicated region
    $region26: #{tpu_custom_call.1} parent=1 // pred_check
      _
    $region27: #{tpu_custom_call.1} parent=1 // pred_check_branch
      %1076 = sbr.rel (0) target = $region29
    $region28: #{tpu_custom_call.1} parent=1 // pred_region
      %s1078 = ssub.s32 128, 128
      %1079 = vsyncadd [#allocation4], %s1078
      %s1081 = sshll.u32 [#allocation3], 4
      %s1082 = int_to_ptr.vmem [resolvable:$true] %s1081
      %1084 = dma.vmem_to_hbm [thread:$0]  %s1082, 128, %s6, [#allocation4]
    $region29: #{tpu_custom_call.1} parent=1 // pred_fallthru
      _
    // Predicated region
    $region30: #{tpu_custom_call.1} parent=1 // pred_check
      _
    $region31: #{tpu_custom_call.1} parent=1 // pred_check_branch
      %1086 = sbr.rel (0) target = $region33
    $region32: #{tpu_custom_call.1} parent=1 // pred_region
      %1087 = dma.done [#allocation4], 128
    $region33: #{tpu_custom_call.1} parent=1 // pred_fallthru
      _
    %1088 = vsyncpa [#allocation4], 1

</llo_original>
